<compile_context>
chip_gen: v7x
topology: tpu7x:2x2x1
jax: 0.10.0
libtpu: 0.0.40
codegen_flags: <defaults>
</compile_context>

<pallas_src>
import functools

import jax
import jax.numpy as jnp
from jax.experimental import pallas as pl
from jax.experimental.pallas import tpu as pltpu


def _mlp_kernel(x_ref, w1_ref, b1_ref, w2_ref, b2_ref, w3_ref, b3_ref, o_ref):
    # fc1 + relu : (tb, D) @ (D, H1) -> (tb, H1); bf16 operands, f32 accumulate.
    h1 = jnp.dot(x_ref[...], w1_ref[...], preferred_element_type=jnp.float32)
    h1 = jnp.maximum(h1 + b1_ref[...], 0.0)          # f32 epilogue (VPU-cheap)
    # dropout (eval) = identity
    # fc2 + relu : (tb, H1) @ (H1, H2) -> (tb, H2)
    h2 = jnp.dot(h1.astype(jnp.bfloat16), w2_ref[...],
                 preferred_element_type=jnp.float32)
    h2 = jnp.maximum(h2 + b2_ref[...], 0.0)
    # dropout (eval) = identity
    # fc3 (lane-dense, zero-padded to 128 output lanes): (tb, H2) @ (H2, 128)
    out = jnp.dot(h2.astype(jnp.bfloat16), w3_ref[...],
                  preferred_element_type=jnp.float32) + b3_ref[...]
    o_ref[...] = out.astype(o_ref.dtype)


@functools.partial(jax.jit, static_argnames=("block_b",))
def mlp_bce_forward(x, w1, b1, w2, b2, w3, b3, *, block_b=256):
    """x: [B, D] float32. Weights are (in, out); biases are (1, out)."""
    B, D = x.shape
    H1 = w1.shape[1]
    H2 = w2.shape[1]
    O = w3.shape[1]
    O_PAD = 128  # lane-dense output slab; slice back to O after the call

    # bf16 matmul operands (native MXU path), f32 biases for the f32 epilogue.
    xb = x.astype(jnp.bfloat16)
    w1b = w1.astype(jnp.bfloat16)
    w2b = w2.astype(jnp.bfloat16)
    w3p = jnp.zeros((H2, O_PAD), jnp.bfloat16).at[:, :O].set(
        w3.astype(jnp.bfloat16))
    b1f = b1.astype(jnp.float32)
    b2f = b2.astype(jnp.float32)
    b3p = jnp.zeros((1, O_PAD), jnp.float32).at[:, :O].set(
        b3.astype(jnp.float32))

    # Pad the batch so the large tile always divides it evenly.
    n_blocks = pl.cdiv(B, block_b)
    B_pad = n_blocks * block_b
    if B_pad != B:
        xb = jnp.pad(xb, ((0, B_pad - B), (0, 0)))

    # Weights/biases are small -> each is a single full-array block that stays
    # resident in VMEM across the batch-tile grid loop (constant index map).
    full = lambda shape: pl.BlockSpec(shape, lambda i: (0,) * len(shape))

    out = pl.pallas_call(
        _mlp_kernel,
        out_shape=jax.ShapeDtypeStruct((B_pad, O_PAD), jnp.float32),
        grid=(n_blocks,),
        in_specs=[
            pl.BlockSpec((block_b, D), lambda i: (i, 0)),  # streamed x tile
            full((D, H1)),
            full((1, H1)),
            full((H1, H2)),
            full((1, H2)),
            full((H2, O_PAD)),
            full((1, O_PAD)),
        ],
        out_specs=pl.BlockSpec((block_b, O_PAD), lambda i: (i, 0)),
        compiler_params=pltpu.CompilerParams(
            dimension_semantics=("parallel",)),
    )(xb, w1b, b1f, w2b, b2f, w3p, b3p)

    return out[:B, :O]


def _init_linear(key, fan_in, fan_out, dtype=jnp.float32):
    """PyTorch-style uniform(-1/sqrt(fan_in), 1/sqrt(fan_in)) init.

    Returns weight as (fan_in, fan_out) (already transposed vs torch) and bias
    as (1, fan_out).
    """
    kw, kb = jax.random.split(key)
    bound = 1.0 / jnp.sqrt(jnp.asarray(fan_in, dtype))
    w = jax.random.uniform(kw, (fan_in, fan_out), dtype, -bound, bound)
    b = jax.random.uniform(kb, (1, fan_out), dtype, -bound, bound)
    return w, b


if __name__ == "__main__":
    # Small shapes consistent with the module (input_dim, hidden1, hidden2, 1).
    B, D, H1, H2, O = 512, 512, 128, 64, 1

    key = jax.random.PRNGKey(0)
    kx, k1, k2, k3 = jax.random.split(key, 4)

    x = jax.random.normal(kx, (B, D), jnp.float32)
    w1, b1 = _init_linear(k1, D, H1)
    w2, b2 = _init_linear(k2, H1, H2)
    w3, b3 = _init_linear(k3, H2, O)

    # block_b=256 -> grid of 2 parallel steps (keeps both v7x TCs busy).
    out = mlp_bce_forward(x, w1, b1, w2, b2, w3, b3, block_b=256)
    out = jax.block_until_ready(out)
    assert out.shape == (B, O)

    # Reference matched to the kernel's numerics: bf16 operands, f32 accumulate.
    xb = x.astype(jnp.bfloat16)
    w1b = w1.astype(jnp.bfloat16)
    w2b = w2.astype(jnp.bfloat16)
    w3b = w3.astype(jnp.bfloat16)
    h1 = jnp.maximum(
        jnp.dot(xb, w1b, preferred_element_type=jnp.float32) + b1, 0.0)
    h2 = jnp.maximum(
        jnp.dot(h1.astype(jnp.bfloat16), w2b,
                preferred_element_type=jnp.float32) + b2, 0.0)
    ref = jnp.dot(h2.astype(jnp.bfloat16), w3b,
                  preferred_element_type=jnp.float32) + b3
    assert jnp.allclose(out, ref, atol=1e-2, rtol=1e-2), float(
        jnp.max(jnp.abs(out - ref)))

    print("KERNEL_OK")
</pallas_src>

<mosaic_0001>
module attributes {stable_mosaic.version = 11 : i64} {
  func.func @_mlp_kernel(%arg0: i32, %arg1: memref<256x512xbf16, #tpu.memory_space<vmem>>, %arg2: memref<512x128xbf16, #tpu.memory_space<vmem>>, %arg3: memref<1x128xf32, #tpu.memory_space<vmem>>, %arg4: memref<128x64xbf16, #tpu.memory_space<vmem>>, %arg5: memref<1x64xf32, #tpu.memory_space<vmem>>, %arg6: memref<64x128xbf16, #tpu.memory_space<vmem>>, %arg7: memref<1x128xf32, #tpu.memory_space<vmem>>, %arg8: memref<256x128xf32, #tpu.memory_space<vmem>>) attributes {dimension_semantics = [#tpu.dimension_semantics<parallel>], iteration_bounds = array<i64: 2>, scalar_prefetch = 0 : i64, scratch_operands = 0 : i64, tpu.core_type = #tpu.core_type<tc>, window_params = [{transform_indices = @transform_0, window_bounds = array<i64: 256, 512>}, {pipeline_mode = #tpu.pipeline_mode<synchronous>, transform_indices = @transform_1, window_bounds = array<i64: 512, 128>}, {pipeline_mode = #tpu.pipeline_mode<synchronous>, transform_indices = @transform_2, window_bounds = array<i64: 1, 128>}, {pipeline_mode = #tpu.pipeline_mode<synchronous>, transform_indices = @transform_3, window_bounds = array<i64: 128, 64>}, {pipeline_mode = #tpu.pipeline_mode<synchronous>, transform_indices = @transform_4, window_bounds = array<i64: 1, 64>}, {pipeline_mode = #tpu.pipeline_mode<synchronous>, transform_indices = @transform_5, window_bounds = array<i64: 64, 128>}, {pipeline_mode = #tpu.pipeline_mode<synchronous>, transform_indices = @transform_6, window_bounds = array<i64: 1, 128>}, {transform_indices = @transform_7, window_bounds = array<i64: 256, 128>}]} {
    %c0 = arith.constant 0 : index
    %c0_0 = arith.constant 0 : index
    %0 = vector.load %arg1[%c0, %c0_0] : memref<256x512xbf16, #tpu.memory_space<vmem>>, vector<256x512xbf16>
    %c0_1 = arith.constant 0 : index
    %c0_2 = arith.constant 0 : index
    %1 = vector.load %arg2[%c0_1, %c0_2] : memref<512x128xbf16, #tpu.memory_space<vmem>>, vector<512x128xbf16>
    %cst = arith.constant dense<0.000000e+00> : vector<256x128xf32>
    %2 = tpu.matmul %0, %1, %cst {dimension_numbers = #tpu.dot_dimension_numbers<[1], [0], [0], [1], [0, 0, 1, 1], [], []>} : vector<256x512xbf16>, vector<512x128xbf16>, vector<256x128xf32> -> vector<256x128xf32>
    %c0_3 = arith.constant 0 : index
    %c0_4 = arith.constant 0 : index
    %3 = vector.load %arg3[%c0_3, %c0_4] : memref<1x128xf32, #tpu.memory_space<vmem>>, vector<1x128xf32>
    %4 = vector.broadcast %3 : vector<1x128xf32> to vector<256x128xf32>
    %5 = arith.addf %2, %4 : vector<256x128xf32>
    %cst_5 = arith.constant 0.000000e+00 : f32
    %6 = vector.broadcast %cst_5 : f32 to vector<256x128xf32>
    %7 = arith.maximumf %5, %6 : vector<256x128xf32>
    %8 = arith.truncf %7 : vector<256x128xf32> to vector<256x128xbf16>
    %c0_6 = arith.constant 0 : index
    %c0_7 = arith.constant 0 : index
    %9 = vector.load %arg4[%c0_6, %c0_7] : memref<128x64xbf16, #tpu.memory_space<vmem>>, vector<128x64xbf16>
    %cst_8 = arith.constant dense<0.000000e+00> : vector<256x64xf32>
    %10 = tpu.matmul %8, %9, %cst_8 {dimension_numbers = #tpu.dot_dimension_numbers<[1], [0], [0], [1], [0, 0, 1, 1], [], []>} : vector<256x128xbf16>, vector<128x64xbf16>, vector<256x64xf32> -> vector<256x64xf32>
    %c0_9 = arith.constant 0 : index
    %c0_10 = arith.constant 0 : index
    %11 = vector.load %arg5[%c0_9, %c0_10] : memref<1x64xf32, #tpu.memory_space<vmem>>, vector<1x64xf32>
    %12 = vector.broadcast %11 : vector<1x64xf32> to vector<256x64xf32>
    %13 = arith.addf %10, %12 : vector<256x64xf32>
    %cst_11 = arith.constant 0.000000e+00 : f32
    %14 = vector.broadcast %cst_11 : f32 to vector<256x64xf32>
    %15 = arith.maximumf %13, %14 : vector<256x64xf32>
    %16 = arith.truncf %15 : vector<256x64xf32> to vector<256x64xbf16>
    %c0_12 = arith.constant 0 : index
    %c0_13 = arith.constant 0 : index
    %17 = vector.load %arg6[%c0_12, %c0_13] : memref<64x128xbf16, #tpu.memory_space<vmem>>, vector<64x128xbf16>
    %cst_14 = arith.constant dense<0.000000e+00> : vector<256x128xf32>
    %18 = tpu.matmul %16, %17, %cst_14 {dimension_numbers = #tpu.dot_dimension_numbers<[1], [0], [0], [1], [0, 0, 1, 1], [], []>} : vector<256x64xbf16>, vector<64x128xbf16>, vector<256x128xf32> -> vector<256x128xf32>
    %c0_15 = arith.constant 0 : index
    %c0_16 = arith.constant 0 : index
    %19 = vector.load %arg7[%c0_15, %c0_16] : memref<1x128xf32, #tpu.memory_space<vmem>>, vector<1x128xf32>
    %20 = vector.broadcast %19 : vector<1x128xf32> to vector<256x128xf32>
    %21 = arith.addf %18, %20 : vector<256x128xf32>
    %c0_17 = arith.constant 0 : index
    %c0_18 = arith.constant 0 : index
    %22 = vector.load %arg8[%c0_17, %c0_18] : memref<256x128xf32, #tpu.memory_space<vmem>>, vector<256x128xf32>
    tpu.vector_store %arg8[%c0_17, %c0_18], %21 {strides = array<i32>} : memref<256x128xf32, #tpu.memory_space<vmem>>, vector<256x128xf32>,
    return
  }
  func.func @transform_0(%arg0: i32) -> (i32, i32) {
    %c0_i32 = arith.constant 0 : i32
    %c0_i32_0 = arith.constant 0 : i32
    return %arg0, %c0_i32 : i32, i32
  }
  func.func @transform_1(%arg0: i32) -> (i32, i32) {
    %c0_i32 = arith.constant 0 : i32
    %c0_i32_0 = arith.constant 0 : i32
    %c0_i32_1 = arith.constant 0 : i32
    return %c0_i32, %c0_i32_0 : i32, i32
  }
  func.func @transform_2(%arg0: i32) -> (i32, i32) {
    %c0_i32 = arith.constant 0 : i32
    %c0_i32_0 = arith.constant 0 : i32
    %c0_i32_1 = arith.constant 0 : i32
    return %c0_i32, %c0_i32_0 : i32, i32
  }
  func.func @transform_3(%arg0: i32) -> (i32, i32) {
    %c0_i32 = arith.constant 0 : i32
    %c0_i32_0 = arith.constant 0 : i32
    %c0_i32_1 = arith.constant 0 : i32
    return %c0_i32, %c0_i32_0 : i32, i32
  }
  func.func @transform_4(%arg0: i32) -> (i32, i32) {
    %c0_i32 = arith.constant 0 : i32
    %c0_i32_0 = arith.constant 0 : i32
    %c0_i32_1 = arith.constant 0 : i32
    return %c0_i32, %c0_i32_0 : i32, i32
  }
  func.func @transform_5(%arg0: i32) -> (i32, i32) {
    %c0_i32 = arith.constant 0 : i32
    %c0_i32_0 = arith.constant 0 : i32
    %c0_i32_1 = arith.constant 0 : i32
    return %c0_i32, %c0_i32_0 : i32, i32
  }
  func.func @transform_6(%arg0: i32) -> (i32, i32) {
    %c0_i32 = arith.constant 0 : i32
    %c0_i32_0 = arith.constant 0 : i32
    %c0_i32_1 = arith.constant 0 : i32
    return %c0_i32, %c0_i32_0 : i32, i32
  }
  func.func @transform_7(%arg0: i32) -> (i32, i32) {
    %c0_i32 = arith.constant 0 : i32
    %c0_i32_0 = arith.constant 0 : i32
    return %arg0, %c0_i32 : i32, i32
  }
}

</mosaic_0001>

<llo_original>
// kernel: mlp_bce_forward.1
$region0: #{mlp_bce_forward.1}
  #allocation0 [shape = 'u32[]', space=smem, size = 0x4, offset = 0x4, fixed_abs, tag = 'smem constant byte address 0x4 - core index']
  #allocation1 [shape = 'u32[144,128]{1,0:T(1,128)}', space=vmem, size = 0x12000, scoped, tag = 'internal scratch']
  %s0 = inlined_call_operand.vmem [shape: bf16[512,512], index: 0, kind: input, shape index: {}]
  %s1 = inlined_call_operand.vmem [shape: bf16[512,128], index: 1, kind: input, shape index: {}]
  %s2 = inlined_call_operand.vmem [shape: f32[1,128], index: 2, kind: input, shape index: {}]
  %s3 = inlined_call_operand.vmem [shape: bf16[128,64], index: 3, kind: input, shape index: {}]
  %s4 = inlined_call_operand.vmem [shape: f32[1,64], index: 4, kind: input, shape index: {}]
  %s5 = inlined_call_operand.vmem [shape: bf16[64,128], index: 5, kind: input, shape index: {}]
  %s6 = inlined_call_operand.vmem [shape: f32[1,128], index: 6, kind: input, shape index: {}]
  %s7 = inlined_call_operand.vmem [shape: f32[512,128], index: 7, kind: output, shape index: {}]
  %s8 = sld [smem:[#allocation0]]
  $region61: #{mlp_bce_forward.1} parent=0
    _
  %s10 = ssub.s32 1, %s8
  %s11 = scalar_select 0, %s10, %s8
  loop: start=0, step=1, limit=4
  $region2: #{mlp_bce_forward.1} parent=0 // loop_pre_header
    _
  $region3: #{mlp_bce_forward.1} parent=0 // loop_header
    %s13 = sphi 0, %s17
    %p14 = scmp.ge.s32.totalorder %s13, 4
    %s23 = sphi 0, %s25
    %s26 = sphi 0, %s23
    %s27 = sphi 0, %s26
    %s43 = sphi 0, %s27
    %s47 = sphi 0, %s47
    %s49 = sphi 0, %s47
    %s50 = sphi 0, %s49
    %s64 = sphi 0, %s50
    %s68 = sphi 0, %s68
    %s70 = sphi 0, %s68
    %s71 = sphi 0, %s70
    %s85 = sphi 0, %s71
    %s89 = sphi 0, %s89
    %s91 = sphi 0, %s89
    %s92 = sphi 0, %s91
    %s106 = sphi 0, %s92
    %s110 = sphi 0, %s110
    %s112 = sphi 0, %s110
    %s113 = sphi 0, %s112
    %s127 = sphi 0, %s113
    %s131 = sphi 0, %s131
    %s133 = sphi 0, %s131
    %s134 = sphi 0, %s133
    %s148 = sphi 0, %s134
    %s152 = sphi 0, %s152
    %s154 = sphi 0, %s152
    %s155 = sphi 0, %s154
    %s169 = sphi 0, %s155
    %s175 = sphi 0, %s177
    %s178 = sphi 0, %s175
    %s179 = sphi 0, %s178
    %s195 = sphi 0, %s179
  $region4: #{mlp_bce_forward.1} parent=0 // loop_header_branch
    %16 = sbr.rel (%p14) target = $region8
  $region5: #{mlp_bce_forward.1} parent=0 // loop_body
    %s18 = ssub.s32 %s13, 1
    %s19 = ssub.s32 %s13, 2
    %s20 = sadd.s32 %s13, 1
    %s21 = ssub.s32 %s13, %s20
    %p22 = scmp.eq.s32.totalorder %s21, 0
    %s24 = sadd.s32 %s23, 1
    %s25 = scalar_select %p22, %s23, %s24
    %p28 = pneg %p22
    %p29 = scmp.eq.s32.totalorder %s13, 1
    %p30 = por %p28, %p29
    %p31 = scmp.ne.s32.totalorder %s23, %s26
    %p32 = scmp.eq.s32.totalorder %s13, 0
    %p33 = por %p31, %p32
    %p34 = scmp.ne.s32.totalorder %s23, %s26
    %p35 = scmp.eq.s32.totalorder %s18, 1
    %p36 = por %p34, %p35
    %p37 = scmp.ne.s32.totalorder %s26, %s27
    %p38 = scmp.eq.s32.totalorder %s18, 0
    %p39 = por %p37, %p38
    %p40 = scmp.ne.s32.totalorder %s26, %s27
    %p41 = scmp.eq.s32.totalorder %s19, 1
    %p42 = por %p40, %p41
    %p44 = scmp.ne.s32.totalorder %s27, %s43
    %p45 = scmp.eq.s32.totalorder %s19, 0
    %p46 = por %p44, %p45
    %s48 = sadd.s32 %s47, 1
    %p51 = scmp.eq.s32.totalorder %s13, 1
    %p52 = scmp.ne.s32.totalorder %s47, %s49
    %p53 = scmp.eq.s32.totalorder %s13, 0
    %p54 = por %p52, %p53
    %p55 = scmp.ne.s32.totalorder %s47, %s49
    %p56 = scmp.eq.s32.totalorder %s18, 1
    %p57 = por %p55, %p56
    %p58 = scmp.ne.s32.totalorder %s49, %s50
    %p59 = scmp.eq.s32.totalorder %s18, 0
    %p60 = por %p58, %p59
    %p61 = scmp.ne.s32.totalorder %s49, %s50
    %p62 = scmp.eq.s32.totalorder %s19, 1
    %p63 = por %p61, %p62
    %p65 = scmp.ne.s32.totalorder %s50, %s64
    %p66 = scmp.eq.s32.totalorder %s19, 0
    %p67 = por %p65, %p66
    %s69 = sadd.s32 %s68, 1
    %p72 = scmp.eq.s32.totalorder %s13, 1
    %p73 = scmp.ne.s32.totalorder %s68, %s70
    %p74 = scmp.eq.s32.totalorder %s13, 0
    %p75 = por %p73, %p74
    %p76 = scmp.ne.s32.totalorder %s68, %s70
    %p77 = scmp.eq.s32.totalorder %s18, 1
    %p78 = por %p76, %p77
    %p79 = scmp.ne.s32.totalorder %s70, %s71
    %p80 = scmp.eq.s32.totalorder %s18, 0
    %p81 = por %p79, %p80
    %p82 = scmp.ne.s32.totalorder %s70, %s71
    %p83 = scmp.eq.s32.totalorder %s19, 1
    %p84 = por %p82, %p83
    %p86 = scmp.ne.s32.totalorder %s71, %s85
    %p87 = scmp.eq.s32.totalorder %s19, 0
    %p88 = por %p86, %p87
    %s90 = sadd.s32 %s89, 1
    %p93 = scmp.eq.s32.totalorder %s13, 1
    %p94 = scmp.ne.s32.totalorder %s89, %s91
    %p95 = scmp.eq.s32.totalorder %s13, 0
    %p96 = por %p94, %p95
    %p97 = scmp.ne.s32.totalorder %s89, %s91
    %p98 = scmp.eq.s32.totalorder %s18, 1
    %p99 = por %p97, %p98
    %p100 = scmp.ne.s32.totalorder %s91, %s92
    %p101 = scmp.eq.s32.totalorder %s18, 0
    %p102 = por %p100, %p101
    %p103 = scmp.ne.s32.totalorder %s91, %s92
    %p104 = scmp.eq.s32.totalorder %s19, 1
    %p105 = por %p103, %p104
    %p107 = scmp.ne.s32.totalorder %s92, %s106
    %p108 = scmp.eq.s32.totalorder %s19, 0
    %p109 = por %p107, %p108
    %s111 = sadd.s32 %s110, 1
    %p114 = scmp.eq.s32.totalorder %s13, 1
    %p115 = scmp.ne.s32.totalorder %s110, %s112
    %p116 = scmp.eq.s32.totalorder %s13, 0
    %p117 = por %p115, %p116
    %p118 = scmp.ne.s32.totalorder %s110, %s112
    %p119 = scmp.eq.s32.totalorder %s18, 1
    %p120 = por %p118, %p119
    %p121 = scmp.ne.s32.totalorder %s112, %s113
    %p122 = scmp.eq.s32.totalorder %s18, 0
    %p123 = por %p121, %p122
    %p124 = scmp.ne.s32.totalorder %s112, %s113
    %p125 = scmp.eq.s32.totalorder %s19, 1
    %p126 = por %p124, %p125
    %p128 = scmp.ne.s32.totalorder %s113, %s127
    %p129 = scmp.eq.s32.totalorder %s19, 0
    %p130 = por %p128, %p129
    %s132 = sadd.s32 %s131, 1
    %p135 = scmp.eq.s32.totalorder %s13, 1
    %p136 = scmp.ne.s32.totalorder %s131, %s133
    %p137 = scmp.eq.s32.totalorder %s13, 0
    %p138 = por %p136, %p137
    %p139 = scmp.ne.s32.totalorder %s131, %s133
    %p140 = scmp.eq.s32.totalorder %s18, 1
    %p141 = por %p139, %p140
    %p142 = scmp.ne.s32.totalorder %s133, %s134
    %p143 = scmp.eq.s32.totalorder %s18, 0
    %p144 = por %p142, %p143
    %p145 = scmp.ne.s32.totalorder %s133, %s134
    %p146 = scmp.eq.s32.totalorder %s19, 1
    %p147 = por %p145, %p146
    %p149 = scmp.ne.s32.totalorder %s134, %s148
    %p150 = scmp.eq.s32.totalorder %s19, 0
    %p151 = por %p149, %p150
    %s153 = sadd.s32 %s152, 1
    %p156 = scmp.eq.s32.totalorder %s13, 1
    %p157 = scmp.ne.s32.totalorder %s152, %s154
    %p158 = scmp.eq.s32.totalorder %s13, 0
    %p159 = por %p157, %p158
    %p160 = scmp.ne.s32.totalorder %s152, %s154
    %p161 = scmp.eq.s32.totalorder %s18, 1
    %p162 = por %p160, %p161
    %p163 = scmp.ne.s32.totalorder %s154, %s155
    %p164 = scmp.eq.s32.totalorder %s18, 0
    %p165 = por %p163, %p164
    %p166 = scmp.ne.s32.totalorder %s154, %s155
    %p167 = scmp.eq.s32.totalorder %s19, 1
    %p168 = por %p166, %p167
    %p170 = scmp.ne.s32.totalorder %s155, %s169
    %p171 = scmp.eq.s32.totalorder %s19, 0
    %p172 = por %p170, %p171
    %s173 = ssub.s32 %s13, %s20
    %p174 = scmp.eq.s32.totalorder %s173, 0
    %s176 = sadd.s32 %s175, 1
    %s177 = scalar_select %p174, %s175, %s176
    %p180 = pneg %p174
    %p181 = scmp.eq.s32.totalorder %s13, 1
    %p182 = por %p180, %p181
    %p183 = scmp.ne.s32.totalorder %s175, %s178
    %p184 = scmp.eq.s32.totalorder %s13, 0
    %p185 = por %p183, %p184
    %p186 = scmp.ne.s32.totalorder %s175, %s178
    %p187 = scmp.eq.s32.totalorder %s18, 1
    %p188 = por %p186, %p187
    %p189 = scmp.ne.s32.totalorder %s178, %s179
    %p190 = scmp.eq.s32.totalorder %s18, 0
    %p191 = por %p189, %p190
    %p192 = scmp.ne.s32.totalorder %s178, %s179
    %p193 = scmp.eq.s32.totalorder %s19, 1
    %p194 = por %p192, %p193
    %p196 = scmp.ne.s32.totalorder %s179, %s195
    %p197 = scmp.eq.s32.totalorder %s19, 0
    %p198 = por %p196, %p197
    %p199 = scmp.le.s32.totalorder 1, %s13
    %p200 = scmp.lt.s32.totalorder %s13, 3
    %p201 = pnand %p199, %p200
    %p202 = pneg %p201
    // Predicated region
    $region9: #{mlp_bce_forward.1} parent=5 // pred_check
      _
    $region10: #{mlp_bce_forward.1} parent=5 // pred_check_branch
      %204 = sbr.rel (%p201) target = $region12
    $region11: #{mlp_bce_forward.1} parent=5 // pred_region
      %s205 = ssub.s32 %s13, 1
      // Predicated region
      $region13: #{mlp_bce_forward.1} parent=11 // pred_check
        %p206 = pneg %p60
      $region14: #{mlp_bce_forward.1} parent=11 // pred_check_branch
        %208 = sbr.rel (%p206) target = $region16
      $region15: #{mlp_bce_forward.1} parent=11 // pred_region
        _
      $region16: #{mlp_bce_forward.1} parent=11 // pred_fallthru
        _
      // Predicated region
      $region17: #{mlp_bce_forward.1} parent=11 // pred_check
        %p209 = pneg %p81
      $region18: #{mlp_bce_forward.1} parent=11 // pred_check_branch
        %211 = sbr.rel (%p209) target = $region20
      $region19: #{mlp_bce_forward.1} parent=11 // pred_region
        _
      $region20: #{mlp_bce_forward.1} parent=11 // pred_fallthru
        _
      // Predicated region
      $region21: #{mlp_bce_forward.1} parent=11 // pred_check
        %p212 = pneg %p102
      $region22: #{mlp_bce_forward.1} parent=11 // pred_check_branch
        %214 = sbr.rel (%p212) target = $region24
      $region23: #{mlp_bce_forward.1} parent=11 // pred_region
        _
      $region24: #{mlp_bce_forward.1} parent=11 // pred_fallthru
        _
      // Predicated region
      $region25: #{mlp_bce_forward.1} parent=11 // pred_check
        %p215 = pneg %p123
      $region26: #{mlp_bce_forward.1} parent=11 // pred_check_branch
        %217 = sbr.rel (%p215) target = $region28
      $region27: #{mlp_bce_forward.1} parent=11 // pred_region
        _
      $region28: #{mlp_bce_forward.1} parent=11 // pred_fallthru
        _
      // Predicated region
      $region29: #{mlp_bce_forward.1} parent=11 // pred_check
        %p218 = pneg %p144
      $region30: #{mlp_bce_forward.1} parent=11 // pred_check_branch
        %220 = sbr.rel (%p218) target = $region32
      $region31: #{mlp_bce_forward.1} parent=11 // pred_region
        _
      $region32: #{mlp_bce_forward.1} parent=11 // pred_fallthru
        _
      // Predicated region
      $region33: #{mlp_bce_forward.1} parent=11 // pred_check
        %p221 = pneg %p165
      $region34: #{mlp_bce_forward.1} parent=11 // pred_check_branch
        %223 = sbr.rel (%p221) target = $region36
      $region35: #{mlp_bce_forward.1} parent=11 // pred_region
        _
      $region36: #{mlp_bce_forward.1} parent=11 // pred_fallthru
        _
    $region12: #{mlp_bce_forward.1} parent=5 // pred_fallthru
      _
    %p224 = scmp.lt.s32.totalorder %s13, 2
    // Predicated region
    $region37: #{mlp_bce_forward.1} parent=5 // pred_check
      %p225 = pneg %p224
    $region38: #{mlp_bce_forward.1} parent=5 // pred_check_branch
      %227 = sbr.rel (%p225) target = $region40
    $region39: #{mlp_bce_forward.1} parent=5 // pred_region
      // Predicated region
      $region41: #{mlp_bce_forward.1} parent=39 // pred_check
        %p228 = pneg %p33
      $region42: #{mlp_bce_forward.1} parent=39 // pred_check_branch
        %230 = sbr.rel (%p228) target = $region44
      $region43: #{mlp_bce_forward.1} parent=39 // pred_region
        %s231 = smul.u32 32, %s13
        %p232 = scmp.lt.s32.totalorder %s231, 63
        %s233 = scalar_select %p232, %s231, 63
        %s234 = smul.addr %s233, 4
        %s235 = smul.addr %s234, 4
        %s236 = scalar_lea.vmem %s0, %s235
        %s237 = smul.u32 32, %s13
      $region44: #{mlp_bce_forward.1} parent=39 // pred_fallthru
        _
    $region40: #{mlp_bce_forward.1} parent=5 // pred_fallthru
      _
    %p238 = scmp.le.s32.totalorder 1, %s13
    %p239 = scmp.lt.s32.totalorder %s13, 3
    %p240 = pnand %p238, %p239
    %p241 = pneg %p240
    // Predicated region
    $region45: #{mlp_bce_forward.1} parent=5 // pred_check
      _
    $region46: #{mlp_bce_forward.1} parent=5 // pred_check_branch
      %243 = sbr.rel (%p240) target = $region48
    $region47: #{mlp_bce_forward.1} parent=5 // pred_region
      %s244 = ssub.s32 %s13, 1
      %s245 = smul.u32 32, %s18
      %p246 = scmp.lt.s32.totalorder %s245, 63
      %s247 = scalar_select %p246, %s245, 63
      %s248 = smul.addr %s247, 4
      %s249 = smul.addr %s248, 4
      %s250 = scalar_lea.vmem %s0, %s249
      %p251 = pneg %p39
      %p252 = pneg %p36
      %p253 = pneg %p60
      %p254 = pneg %p57
      %p255 = pneg %p81
      %p256 = pneg %p78
      %p257 = pneg %p102
      %p258 = pneg %p99
      %p259 = pneg %p123
      %p260 = pneg %p120
      %p261 = pneg %p144
      %p262 = pneg %p141
      %p263 = pneg %p165
      %p264 = pneg %p162
      %p265 = pneg %p191
      %p266 = pneg %p188
      %s267 = smul.u32 32, %s18
      %p268 = scmp.lt.s32.totalorder %s267, 63
      %s269 = scalar_select %p268, %s267, 63
      %s270 = smul.addr %s269, 8
      %s271 = scalar_lea.vmem %s7, %s270
      %s272 = smul.u32 32, %s18
      %p273 = scmp.lt.s32.totalorder %s272, 63
      %s274 = scalar_select %p273, %s272, 63
      %s275 = smul.addr %s274, 4
      %s276 = smul.addr %s275, 4
      %s277 = scalar_lea.vmem %s0, %s276
      %s278 = smul.u32 32, %s18
      %s279 = smul.u32 32, %s18
      %p280 = scmp.lt.s32.totalorder %s279, 63
      %s281 = scalar_select %p280, %s279, 63
      %s282 = smul.addr %s281, 8
      %s283 = scalar_lea.vmem %s7, %s282
      %s284 = smul.u32 32, %s18
      %v286 = vld [vmem:[%s277] sm:$0xff]
      %v287 = vld [vmem:[%s277 + $0x8] sm:$0xff]
      %v288 = vld [vmem:[%s277 + $0x10] sm:$0xff]
      %v289 = vld [vmem:[%s277 + $0x18] sm:$0xff]
      %v290 = vld [vmem:[%s277 + $0x20] sm:$0xff]
      %v291 = vld [vmem:[%s277 + $0x28] sm:$0xff]
      %v292 = vld [vmem:[%s277 + $0x30] sm:$0xff]
      %v293 = vld [vmem:[%s277 + $0x38] sm:$0xff]
      %v294 = vld [vmem:[%s277 + $0x40] sm:$0xff]
      %v295 = vld [vmem:[%s277 + $0x48] sm:$0xff]
      %v296 = vld [vmem:[%s277 + $0x50] sm:$0xff]
      %v297 = vld [vmem:[%s277 + $0x58] sm:$0xff]
      %v298 = vld [vmem:[%s277 + $0x60] sm:$0xff]
      %v299 = vld [vmem:[%s277 + $0x68] sm:$0xff]
      %v300 = vld [vmem:[%s277 + $0x70] sm:$0xff]
      %v301 = vld [vmem:[%s277 + $0x78] sm:$0xff]
      %v302 = vld [vmem:[%s277 + $0x80] sm:$0xff]
      %v303 = vld [vmem:[%s277 + $0x88] sm:$0xff]
      %v304 = vld [vmem:[%s277 + $0x90] sm:$0xff]
      %v305 = vld [vmem:[%s277 + $0x98] sm:$0xff]
      %v306 = vld [vmem:[%s277 + $0xa0] sm:$0xff]
      %v307 = vld [vmem:[%s277 + $0xa8] sm:$0xff]
      %v308 = vld [vmem:[%s277 + $0xb0] sm:$0xff]
      %v309 = vld [vmem:[%s277 + $0xb8] sm:$0xff]
      %v310 = vld [vmem:[%s277 + $0xc0] sm:$0xff]
      %v311 = vld [vmem:[%s277 + $0xc8] sm:$0xff]
      %v312 = vld [vmem:[%s277 + $0xd0] sm:$0xff]
      %v313 = vld [vmem:[%s277 + $0xd8] sm:$0xff]
      %v314 = vld [vmem:[%s277 + $0xe0] sm:$0xff]
      %v315 = vld [vmem:[%s277 + $0xe8] sm:$0xff]
      %v316 = vld [vmem:[%s277 + $0xf0] sm:$0xff]
      %v317 = vld [vmem:[%s277 + $0xf8] sm:$0xff]
      %v318 = vld [vmem:[%s277 + $0x100] sm:$0xff]
      %v319 = vld [vmem:[%s277 + $0x108] sm:$0xff]
      %v320 = vld [vmem:[%s277 + $0x110] sm:$0xff]
      %v321 = vld [vmem:[%s277 + $0x118] sm:$0xff]
      %v322 = vld [vmem:[%s277 + $0x120] sm:$0xff]
      %v323 = vld [vmem:[%s277 + $0x128] sm:$0xff]
      %v324 = vld [vmem:[%s277 + $0x130] sm:$0xff]
      %v325 = vld [vmem:[%s277 + $0x138] sm:$0xff]
      %v326 = vld [vmem:[%s277 + $0x140] sm:$0xff]
      %v327 = vld [vmem:[%s277 + $0x148] sm:$0xff]
      %v328 = vld [vmem:[%s277 + $0x150] sm:$0xff]
      %v329 = vld [vmem:[%s277 + $0x158] sm:$0xff]
      %v330 = vld [vmem:[%s277 + $0x160] sm:$0xff]
      %v331 = vld [vmem:[%s277 + $0x168] sm:$0xff]
      %v332 = vld [vmem:[%s277 + $0x170] sm:$0xff]
      %v333 = vld [vmem:[%s277 + $0x178] sm:$0xff]
      %v334 = vld [vmem:[%s277 + $0x180] sm:$0xff]
      %v335 = vld [vmem:[%s277 + $0x188] sm:$0xff]
      %v336 = vld [vmem:[%s277 + $0x190] sm:$0xff]
      %v337 = vld [vmem:[%s277 + $0x198] sm:$0xff]
      %v338 = vld [vmem:[%s277 + $0x1a0] sm:$0xff]
      %v339 = vld [vmem:[%s277 + $0x1a8] sm:$0xff]
      %v340 = vld [vmem:[%s277 + $0x1b0] sm:$0xff]
      %v341 = vld [vmem:[%s277 + $0x1b8] sm:$0xff]
      %v342 = vld [vmem:[%s277 + $0x1c0] sm:$0xff]
      %v343 = vld [vmem:[%s277 + $0x1c8] sm:$0xff]
      %v344 = vld [vmem:[%s277 + $0x1d0] sm:$0xff]
      %v345 = vld [vmem:[%s277 + $0x1d8] sm:$0xff]
      %v346 = vld [vmem:[%s277 + $0x1e0] sm:$0xff]
      %v347 = vld [vmem:[%s277 + $0x1e8] sm:$0xff]
      %v348 = vld [vmem:[%s277 + $0x1f0] sm:$0xff]
      %v349 = vld [vmem:[%s277 + $0x1f8] sm:$0xff]
      %v350 = vld [vmem:[%s1] sm:$0xf]
      %v351 = vld [vmem:[%s1 + $0x4] sm:$0xf]
      %v352 = vld [vmem:[%s1 + $0x8] sm:$0xf]
      %v353 = vld [vmem:[%s1 + $0xc] sm:$0xf]
      %v354 = vld [vmem:[%s1 + $0x10] sm:$0xf]
      %v355 = vld [vmem:[%s1 + $0x14] sm:$0xf]
      %v356 = vld [vmem:[%s1 + $0x18] sm:$0xf]
      %v357 = vld [vmem:[%s1 + $0x1c] sm:$0xf]
      %v358 = vld [vmem:[%s1 + $0x20] sm:$0xf]
      %v359 = vld [vmem:[%s1 + $0x24] sm:$0xf]
      %v360 = vld [vmem:[%s1 + $0x28] sm:$0xf]
      %v361 = vld [vmem:[%s1 + $0x2c] sm:$0xf]
      %v362 = vld [vmem:[%s1 + $0x30] sm:$0xf]
      %v363 = vld [vmem:[%s1 + $0x34] sm:$0xf]
      %v364 = vld [vmem:[%s1 + $0x38] sm:$0xf]
      %v365 = vld [vmem:[%s1 + $0x3c] sm:$0xf]
      %v366 = vld [vmem:[%s1 + $0x40] sm:$0xf]
      %v367 = vld [vmem:[%s1 + $0x44] sm:$0xf]
      %v368 = vld [vmem:[%s1 + $0x48] sm:$0xf]
      %v369 = vld [vmem:[%s1 + $0x4c] sm:$0xf]
      %v370 = vld [vmem:[%s1 + $0x50] sm:$0xf]
      %v371 = vld [vmem:[%s1 + $0x54] sm:$0xf]
      %v372 = vld [vmem:[%s1 + $0x58] sm:$0xf]
      %v373 = vld [vmem:[%s1 + $0x5c] sm:$0xf]
      %v374 = vld [vmem:[%s1 + $0x60] sm:$0xf]
      %v375 = vld [vmem:[%s1 + $0x64] sm:$0xf]
      %v376 = vld [vmem:[%s1 + $0x68] sm:$0xf]
      %v377 = vld [vmem:[%s1 + $0x6c] sm:$0xf]
      %v378 = vld [vmem:[%s1 + $0x70] sm:$0xf]
      %v379 = vld [vmem:[%s1 + $0x74] sm:$0xf]
      %v380 = vld [vmem:[%s1 + $0x78] sm:$0xf]
      %v381 = vld [vmem:[%s1 + $0x7c] sm:$0xf]
      %v382 = vld [vmem:[%s1 + $0x80] sm:$0xf]
      %v383 = vld [vmem:[%s1 + $0x84] sm:$0xf]
      %v384 = vld [vmem:[%s1 + $0x88] sm:$0xf]
      %v385 = vld [vmem:[%s1 + $0x8c] sm:$0xf]
      %v386 = vld [vmem:[%s1 + $0x90] sm:$0xf]
      %v387 = vld [vmem:[%s1 + $0x94] sm:$0xf]
      %v388 = vld [vmem:[%s1 + $0x98] sm:$0xf]
      %v389 = vld [vmem:[%s1 + $0x9c] sm:$0xf]
      %v390 = vld [vmem:[%s1 + $0xa0] sm:$0xf]
      %v391 = vld [vmem:[%s1 + $0xa4] sm:$0xf]
      %v392 = vld [vmem:[%s1 + $0xa8] sm:$0xf]
      %v393 = vld [vmem:[%s1 + $0xac] sm:$0xf]
      %v394 = vld [vmem:[%s1 + $0xb0] sm:$0xf]
      %v395 = vld [vmem:[%s1 + $0xb4] sm:$0xf]
      %v396 = vld [vmem:[%s1 + $0xb8] sm:$0xf]
      %v397 = vld [vmem:[%s1 + $0xbc] sm:$0xf]
      %v398 = vld [vmem:[%s1 + $0xc0] sm:$0xf]
      %v399 = vld [vmem:[%s1 + $0xc4] sm:$0xf]
      %v400 = vld [vmem:[%s1 + $0xc8] sm:$0xf]
      %v401 = vld [vmem:[%s1 + $0xcc] sm:$0xf]
      %v402 = vld [vmem:[%s1 + $0xd0] sm:$0xf]
      %v403 = vld [vmem:[%s1 + $0xd4] sm:$0xf]
      %v404 = vld [vmem:[%s1 + $0xd8] sm:$0xf]
      %v405 = vld [vmem:[%s1 + $0xdc] sm:$0xf]
      %v406 = vld [vmem:[%s1 + $0xe0] sm:$0xf]
      %v407 = vld [vmem:[%s1 + $0xe4] sm:$0xf]
      %v408 = vld [vmem:[%s1 + $0xe8] sm:$0xf]
      %v409 = vld [vmem:[%s1 + $0xec] sm:$0xf]
      %v410 = vld [vmem:[%s1 + $0xf0] sm:$0xf]
      %v411 = vld [vmem:[%s1 + $0xf4] sm:$0xf]
      %v412 = vld [vmem:[%s1 + $0xf8] sm:$0xf]
      %v413 = vld [vmem:[%s1 + $0xfc] sm:$0xf]
      %v414 = vld [vmem:[%s2] sm:$0x1]
      %v416 = vlaneseq
      %v417 = vshrl.u32 %v416, 7
      %v418 = vsub.s32 0, %v417
      %v419 = vrot.slane %v414, %v418
      %v485 = vunpack.c.l.b16 %v286
      %v486 = vunpack.c.h.b16 %v286
      %v487 = vunpack.c.l.b16 %v287
      %v488 = vunpack.c.h.b16 %v287
      %v489 = vunpack.c.l.b16 %v288
      %v490 = vunpack.c.h.b16 %v288
      %v491 = vunpack.c.l.b16 %v289
      %v492 = vunpack.c.h.b16 %v289
      %v493 = vunpack.c.l.b16 %v290
      %v494 = vunpack.c.h.b16 %v290
      %v495 = vunpack.c.l.b16 %v291
      %v496 = vunpack.c.h.b16 %v291
      %v497 = vunpack.c.l.b16 %v292
      %v498 = vunpack.c.h.b16 %v292
      %v499 = vunpack.c.l.b16 %v293
      %v500 = vunpack.c.h.b16 %v293
      %v501 = vunpack.c.l.b16 %v294
      %v502 = vunpack.c.h.b16 %v294
      %v503 = vunpack.c.l.b16 %v295
      %v504 = vunpack.c.h.b16 %v295
      %v505 = vunpack.c.l.b16 %v296
      %v506 = vunpack.c.h.b16 %v296
      %v507 = vunpack.c.l.b16 %v297
      %v508 = vunpack.c.h.b16 %v297
      %v509 = vunpack.c.l.b16 %v298
      %v510 = vunpack.c.h.b16 %v298
      %v511 = vunpack.c.l.b16 %v299
      %v512 = vunpack.c.h.b16 %v299
      %v513 = vunpack.c.l.b16 %v300
      %v514 = vunpack.c.h.b16 %v300
      %v515 = vunpack.c.l.b16 %v301
      %v516 = vunpack.c.h.b16 %v301
      %v517 = vunpack.c.l.b16 %v302
      %v518 = vunpack.c.h.b16 %v302
      %v519 = vunpack.c.l.b16 %v303
      %v520 = vunpack.c.h.b16 %v303
      %v521 = vunpack.c.l.b16 %v304
      %v522 = vunpack.c.h.b16 %v304
      %v523 = vunpack.c.l.b16 %v305
      %v524 = vunpack.c.h.b16 %v305
      %v525 = vunpack.c.l.b16 %v306
      %v526 = vunpack.c.h.b16 %v306
      %v527 = vunpack.c.l.b16 %v307
      %v528 = vunpack.c.h.b16 %v307
      %v529 = vunpack.c.l.b16 %v308
      %v530 = vunpack.c.h.b16 %v308
      %v531 = vunpack.c.l.b16 %v309
      %v532 = vunpack.c.h.b16 %v309
      %v533 = vunpack.c.l.b16 %v310
      %v534 = vunpack.c.h.b16 %v310
      %v535 = vunpack.c.l.b16 %v311
      %v536 = vunpack.c.h.b16 %v311
      %v537 = vunpack.c.l.b16 %v312
      %v538 = vunpack.c.h.b16 %v312
      %v539 = vunpack.c.l.b16 %v313
      %v540 = vunpack.c.h.b16 %v313
      %v541 = vunpack.c.l.b16 %v314
      %v542 = vunpack.c.h.b16 %v314
      %v543 = vunpack.c.l.b16 %v315
      %v544 = vunpack.c.h.b16 %v315
      %v545 = vunpack.c.l.b16 %v316
      %v546 = vunpack.c.h.b16 %v316
      %v547 = vunpack.c.l.b16 %v317
      %v548 = vunpack.c.h.b16 %v317
      %v549 = vunpack.c.l.b16 %v318
      %v550 = vunpack.c.h.b16 %v318
      %v551 = vunpack.c.l.b16 %v319
      %v552 = vunpack.c.h.b16 %v319
      %v553 = vunpack.c.l.b16 %v320
      %v554 = vunpack.c.h.b16 %v320
      %v555 = vunpack.c.l.b16 %v321
      %v556 = vunpack.c.h.b16 %v321
      %v557 = vunpack.c.l.b16 %v322
      %v558 = vunpack.c.h.b16 %v322
      %v559 = vunpack.c.l.b16 %v323
      %v560 = vunpack.c.h.b16 %v323
      %v561 = vunpack.c.l.b16 %v324
      %v562 = vunpack.c.h.b16 %v324
      %v563 = vunpack.c.l.b16 %v325
      %v564 = vunpack.c.h.b16 %v325
      %v565 = vunpack.c.l.b16 %v326
      %v566 = vunpack.c.h.b16 %v326
      %v567 = vunpack.c.l.b16 %v327
      %v568 = vunpack.c.h.b16 %v327
      %v569 = vunpack.c.l.b16 %v328
      %v570 = vunpack.c.h.b16 %v328
      %v571 = vunpack.c.l.b16 %v329
      %v572 = vunpack.c.h.b16 %v329
      %v573 = vunpack.c.l.b16 %v330
      %v574 = vunpack.c.h.b16 %v330
      %v575 = vunpack.c.l.b16 %v331
      %v576 = vunpack.c.h.b16 %v331
      %v577 = vunpack.c.l.b16 %v332
      %v578 = vunpack.c.h.b16 %v332
      %v579 = vunpack.c.l.b16 %v333
      %v580 = vunpack.c.h.b16 %v333
      %v581 = vunpack.c.l.b16 %v334
      %v582 = vunpack.c.h.b16 %v334
      %v583 = vunpack.c.l.b16 %v335
      %v584 = vunpack.c.h.b16 %v335
      %v585 = vunpack.c.l.b16 %v336
      %v586 = vunpack.c.h.b16 %v336
      %v587 = vunpack.c.l.b16 %v337
      %v588 = vunpack.c.h.b16 %v337
      %v589 = vunpack.c.l.b16 %v338
      %v590 = vunpack.c.h.b16 %v338
      %v591 = vunpack.c.l.b16 %v339
      %v592 = vunpack.c.h.b16 %v339
      %v593 = vunpack.c.l.b16 %v340
      %v594 = vunpack.c.h.b16 %v340
      %v595 = vunpack.c.l.b16 %v341
      %v596 = vunpack.c.h.b16 %v341
      %v597 = vunpack.c.l.b16 %v342
      %v598 = vunpack.c.h.b16 %v342
      %v599 = vunpack.c.l.b16 %v343
      %v600 = vunpack.c.h.b16 %v343
      %v601 = vunpack.c.l.b16 %v344
      %v602 = vunpack.c.h.b16 %v344
      %v603 = vunpack.c.l.b16 %v345
      %v604 = vunpack.c.h.b16 %v345
      %v605 = vunpack.c.l.b16 %v346
      %v606 = vunpack.c.h.b16 %v346
      %v607 = vunpack.c.l.b16 %v347
      %v608 = vunpack.c.h.b16 %v347
      %v609 = vunpack.c.l.b16 %v348
      %v610 = vunpack.c.h.b16 %v348
      %v611 = vunpack.c.l.b16 %v349
      %v612 = vunpack.c.h.b16 %v349
      %v613 = vpack.c.b16 %v489, %v485
      %v614 = vpack.c.b16 %v490, %v486
      %v615 = vpack.c.b16 %v491, %v487
      %v616 = vpack.c.b16 %v492, %v488
      %v617 = vpack.c.b16 %v497, %v493
      %v618 = vpack.c.b16 %v498, %v494
      %v619 = vpack.c.b16 %v499, %v495
      %v620 = vpack.c.b16 %v500, %v496
      %v621 = vpack.c.b16 %v505, %v501
      %v622 = vpack.c.b16 %v506, %v502
      %v623 = vpack.c.b16 %v507, %v503
      %v624 = vpack.c.b16 %v508, %v504
      %v625 = vpack.c.b16 %v513, %v509
      %v626 = vpack.c.b16 %v514, %v510
      %v627 = vpack.c.b16 %v515, %v511
      %v628 = vpack.c.b16 %v516, %v512
      %v629 = vpack.c.b16 %v521, %v517
      %v630 = vpack.c.b16 %v522, %v518
      %v631 = vpack.c.b16 %v523, %v519
      %v632 = vpack.c.b16 %v524, %v520
      %v633 = vpack.c.b16 %v529, %v525
      %v634 = vpack.c.b16 %v530, %v526
      %v635 = vpack.c.b16 %v531, %v527
      %v636 = vpack.c.b16 %v532, %v528
      %v637 = vpack.c.b16 %v537, %v533
      %v638 = vpack.c.b16 %v538, %v534
      %v639 = vpack.c.b16 %v539, %v535
      %v640 = vpack.c.b16 %v540, %v536
      %v641 = vpack.c.b16 %v545, %v541
      %v642 = vpack.c.b16 %v546, %v542
      %v643 = vpack.c.b16 %v547, %v543
      %v644 = vpack.c.b16 %v548, %v544
      %v645 = vpack.c.b16 %v553, %v549
      %v646 = vpack.c.b16 %v554, %v550
      %v647 = vpack.c.b16 %v555, %v551
      %v648 = vpack.c.b16 %v556, %v552
      %v649 = vpack.c.b16 %v561, %v557
      %v650 = vpack.c.b16 %v562, %v558
      %v651 = vpack.c.b16 %v563, %v559
      %v652 = vpack.c.b16 %v564, %v560
      %v653 = vpack.c.b16 %v569, %v565
      %v654 = vpack.c.b16 %v570, %v566
      %v655 = vpack.c.b16 %v571, %v567
      %v656 = vpack.c.b16 %v572, %v568
      %v657 = vpack.c.b16 %v577, %v573
      %v658 = vpack.c.b16 %v578, %v574
      %v659 = vpack.c.b16 %v579, %v575
      %v660 = vpack.c.b16 %v580, %v576
      %v661 = vpack.c.b16 %v585, %v581
      %v662 = vpack.c.b16 %v586, %v582
      %v663 = vpack.c.b16 %v587, %v583
      %v664 = vpack.c.b16 %v588, %v584
      %v665 = vpack.c.b16 %v593, %v589
      %v666 = vpack.c.b16 %v594, %v590
      %v667 = vpack.c.b16 %v595, %v591
      %v668 = vpack.c.b16 %v596, %v592
      %v669 = vpack.c.b16 %v601, %v597
      %v670 = vpack.c.b16 %v602, %v598
      %v671 = vpack.c.b16 %v603, %v599
      %v672 = vpack.c.b16 %v604, %v600
      %v673 = vpack.c.b16 %v609, %v605
      %v674 = vpack.c.b16 %v610, %v606
      %v675 = vpack.c.b16 %v611, %v607
      %v676 = vpack.c.b16 %v612, %v608
      %v805 = vunpack.c.l.b16 %v350
      %v806 = vunpack.c.l.b16 %v351
      %v807 = vunpack.c.l.b16 %v352
      %v808 = vunpack.c.l.b16 %v353
      %v809 = vunpack.c.l.b16 %v354
      %v810 = vunpack.c.l.b16 %v355
      %v811 = vunpack.c.l.b16 %v356
      %v812 = vunpack.c.l.b16 %v357
      %v813 = vunpack.c.l.b16 %v358
      %v814 = vunpack.c.l.b16 %v359
      %v815 = vunpack.c.l.b16 %v360
      %v816 = vunpack.c.l.b16 %v361
      %v817 = vunpack.c.l.b16 %v362
      %v818 = vunpack.c.l.b16 %v363
      %v819 = vunpack.c.l.b16 %v364
      %v820 = vunpack.c.l.b16 %v365
      %v821 = vunpack.c.l.b16 %v366
      %v822 = vunpack.c.l.b16 %v367
      %v823 = vunpack.c.l.b16 %v368
      %v824 = vunpack.c.l.b16 %v369
      %v825 = vunpack.c.l.b16 %v370
      %v826 = vunpack.c.l.b16 %v371
      %v827 = vunpack.c.l.b16 %v372
      %v828 = vunpack.c.l.b16 %v373
      %v829 = vunpack.c.l.b16 %v374
      %v830 = vunpack.c.l.b16 %v375
      %v831 = vunpack.c.l.b16 %v376
      %v832 = vunpack.c.l.b16 %v377
      %v833 = vunpack.c.l.b16 %v378
      %v834 = vunpack.c.l.b16 %v379
      %v835 = vunpack.c.l.b16 %v380
      %v836 = vunpack.c.l.b16 %v381
      %v837 = vunpack.c.l.b16 %v382
      %v838 = vunpack.c.l.b16 %v383
      %v839 = vunpack.c.l.b16 %v384
      %v840 = vunpack.c.l.b16 %v385
      %v841 = vunpack.c.l.b16 %v386
      %v842 = vunpack.c.l.b16 %v387
      %v843 = vunpack.c.l.b16 %v388
      %v844 = vunpack.c.l.b16 %v389
      %v845 = vunpack.c.l.b16 %v390
      %v846 = vunpack.c.l.b16 %v391
      %v847 = vunpack.c.l.b16 %v392
      %v848 = vunpack.c.l.b16 %v393
      %v849 = vunpack.c.l.b16 %v394
      %v850 = vunpack.c.l.b16 %v395
      %v851 = vunpack.c.l.b16 %v396
      %v852 = vunpack.c.l.b16 %v397
      %v853 = vunpack.c.l.b16 %v398
      %v854 = vunpack.c.l.b16 %v399
      %v855 = vunpack.c.l.b16 %v400
      %v856 = vunpack.c.l.b16 %v401
      %v857 = vunpack.c.l.b16 %v402
      %v858 = vunpack.c.l.b16 %v403
      %v859 = vunpack.c.l.b16 %v404
      %v860 = vunpack.c.l.b16 %v405
      %v861 = vunpack.c.l.b16 %v406
      %v862 = vunpack.c.l.b16 %v407
      %v863 = vunpack.c.l.b16 %v408
      %v864 = vunpack.c.l.b16 %v409
      %v865 = vunpack.c.l.b16 %v410
      %v866 = vunpack.c.l.b16 %v411
      %v867 = vunpack.c.l.b16 %v412
      %v868 = vunpack.c.l.b16 %v413
      %v869 = vpack.c.b16 %v806, %v805
      %v870 = vpack.c.b16 %v808, %v807
      %v871 = vpack.c.b16 %v810, %v809
      %v872 = vpack.c.b16 %v812, %v811
      %v873 = vpack.c.b16 %v814, %v813
      %v874 = vpack.c.b16 %v816, %v815
      %v875 = vpack.c.b16 %v818, %v817
      %v876 = vpack.c.b16 %v820, %v819
      %v877 = vpack.c.b16 %v822, %v821
      %v878 = vpack.c.b16 %v824, %v823
      %v879 = vpack.c.b16 %v826, %v825
      %v880 = vpack.c.b16 %v828, %v827
      %v881 = vpack.c.b16 %v830, %v829
      %v882 = vpack.c.b16 %v832, %v831
      %v883 = vpack.c.b16 %v834, %v833
      %v884 = vpack.c.b16 %v836, %v835
      %v885 = vpack.c.b16 %v838, %v837
      %v886 = vpack.c.b16 %v840, %v839
      %v887 = vpack.c.b16 %v842, %v841
      %v888 = vpack.c.b16 %v844, %v843
      %v889 = vpack.c.b16 %v846, %v845
      %v890 = vpack.c.b16 %v848, %v847
      %v891 = vpack.c.b16 %v850, %v849
      %v892 = vpack.c.b16 %v852, %v851
      %v893 = vpack.c.b16 %v854, %v853
      %v894 = vpack.c.b16 %v856, %v855
      %v895 = vpack.c.b16 %v858, %v857
      %v896 = vpack.c.b16 %v860, %v859
      %v897 = vpack.c.b16 %v862, %v861
      %v898 = vpack.c.b16 %v864, %v863
      %v899 = vpack.c.b16 %v866, %v865
      %v900 = vpack.c.b16 %v868, %v867
      %933 = vmatprep.subr.bf16.mxu0 0
      %934 = vmatpush1.bf16.msra.mxu0 %v869
      %935 = vmatprep.subr.bf16.mxu0 0
      %936 = vmatpush1.bf16.msra.mxu0 %v870
      %937 = vmatprep.subr.bf16.mxu0 0
      %938 = vmatpush1.bf16.msra.mxu0 %v871
      %939 = vmatprep.subr.bf16.mxu0 0
      %940 = vmatpush1.bf16.msra.mxu0 %v872
      %941 = vmatprep.subr.bf16.mxu0 0
      %942 = vmatpush1.bf16.msra.mxu0 %v873
      %943 = vmatprep.subr.bf16.mxu0 0
      %944 = vmatpush1.bf16.msra.mxu0 %v874
      %945 = vmatprep.subr.bf16.mxu0 0
      %946 = vmatpush1.bf16.msra.mxu0 %v875
      %947 = vmatprep.subr.bf16.mxu0 0
      %948 = vmatpush1.bf16.msra.mxu0 %v876
      %949 = vmatprep.subr.bf16.mxu0 0
      %950 = vmatpush1.bf16.msra.mxu0 %v877
      %951 = vmatprep.subr.bf16.mxu0 0
      %952 = vmatpush1.bf16.msra.mxu0 %v878
      %953 = vmatprep.subr.bf16.mxu0 0
      %954 = vmatpush1.bf16.msra.mxu0 %v879
      %955 = vmatprep.subr.bf16.mxu0 0
      %956 = vmatpush1.bf16.msra.mxu0 %v880
      %957 = vmatprep.subr.bf16.mxu0 0
      %958 = vmatpush1.bf16.msra.mxu0 %v881
      %959 = vmatprep.subr.bf16.mxu0 0
      %960 = vmatpush1.bf16.msra.mxu0 %v882
      %961 = vmatprep.subr.bf16.mxu0 0
      %962 = vmatpush1.bf16.msra.mxu0 %v883
      %963 = vmatprep.subr.bf16.mxu0 0
      %964 = vmatpush1.bf16.msra.mxu0 %v884
      %965 = vmatprep.mubr.bf16.mxu0 %v614
      %966 = vmatmul.mubr.bf16.gmra.mrb[0].mxu0 %v613
      %v967 = vpop.f32.mrb[0].mxu0
      %v968 = vadd.f32 %v419, %v967
      %v969 = vpop.f32.mrb[0].mxu0
      %v970 = vpop.f32.mrb[0].mxu0
      %v971 = vadd.f32 %v419, %v970
      %v972 = vpop.f32.mrb[0].mxu0
      %973 = vmatprep.mubr.bf16.mxu0 %v618
      %974 = vmatmul.mubr.bf16.gmra.mrb[0].mxu0 %v617
      %v975 = vpop.f32.mrb[0].mxu0
      %v976 = vadd.f32 %v419, %v975
      %v977 = vpop.f32.mrb[0].mxu0
      %v978 = vpop.f32.mrb[0].mxu0
      %v979 = vadd.f32 %v419, %v978
      %v980 = vpop.f32.mrb[0].mxu0
      %981 = vmatprep.mubr.bf16.mxu0 %v622
      %982 = vmatmul.mubr.bf16.gmra.mrb[0].mxu0 %v621
      %v983 = vpop.f32.mrb[0].mxu0
      %v984 = vadd.f32 %v419, %v983
      %v985 = vpop.f32.mrb[0].mxu0
      %v986 = vpop.f32.mrb[0].mxu0
      %v987 = vadd.f32 %v419, %v986
      %v988 = vpop.f32.mrb[0].mxu0
      %989 = vmatprep.mubr.bf16.mxu0 %v626
      %990 = vmatmul.mubr.bf16.gmra.mrb[0].mxu0 %v625
      %v991 = vpop.f32.mrb[0].mxu0
      %v992 = vadd.f32 %v419, %v991
      %v993 = vpop.f32.mrb[0].mxu0
      %v994 = vpop.f32.mrb[0].mxu0
      %v995 = vadd.f32 %v419, %v994
      %v996 = vpop.f32.mrb[0].mxu0
      %997 = vmatprep.mubr.bf16.mxu0 %v630
      %998 = vmatmul.mubr.bf16.gmra.mrb[0].mxu0 %v629
      %v999 = vpop.f32.mrb[0].mxu0
      %v1000 = vadd.f32 %v419, %v999
      %v1001 = vpop.f32.mrb[0].mxu0
      %v1002 = vpop.f32.mrb[0].mxu0
      %v1003 = vadd.f32 %v419, %v1002
      %v1004 = vpop.f32.mrb[0].mxu0
      %1005 = vmatprep.mubr.bf16.mxu0 %v634
      %1006 = vmatmul.mubr.bf16.gmra.mrb[0].mxu0 %v633
      %v1007 = vpop.f32.mrb[0].mxu0
      %v1008 = vadd.f32 %v419, %v1007
      %v1009 = vpop.f32.mrb[0].mxu0
      %v1010 = vpop.f32.mrb[0].mxu0
      %v1011 = vadd.f32 %v419, %v1010
      %v1012 = vpop.f32.mrb[0].mxu0
      %1013 = vmatprep.mubr.bf16.mxu0 %v638
      %1014 = vmatmul.mubr.bf16.gmra.mrb[0].mxu0 %v637
      %v1015 = vpop.f32.mrb[0].mxu0
      %v1016 = vadd.f32 %v419, %v1015
      %v1017 = vpop.f32.mrb[0].mxu0
      %v1018 = vpop.f32.mrb[0].mxu0
      %v1019 = vadd.f32 %v419, %v1018
      %v1020 = vpop.f32.mrb[0].mxu0
      %1021 = vmatprep.mubr.bf16.mxu0 %v642
      %1022 = vmatmul.mubr.bf16.gmra.mrb[0].mxu0 %v641
      %v1023 = vpop.f32.mrb[0].mxu0
      %v1024 = vadd.f32 %v419, %v1023
      %v1025 = vpop.f32.mrb[0].mxu0
      %v1026 = vpop.f32.mrb[0].mxu0
      %v1027 = vadd.f32 %v419, %v1026
      %v1028 = vpop.f32.mrb[0].mxu0
      %1029 = vmatprep.mubr.bf16.mxu0 %v646
      %1030 = vmatmul.mubr.bf16.gmra.mrb[0].mxu0 %v645
      %v1031 = vpop.f32.mrb[0].mxu0
      %v1032 = vadd.f32 %v419, %v1031
      %v1033 = vpop.f32.mrb[0].mxu0
      %v1034 = vpop.f32.mrb[0].mxu0
      %v1035 = vadd.f32 %v419, %v1034
      %v1036 = vpop.f32.mrb[0].mxu0
      %1037 = vmatprep.mubr.bf16.mxu0 %v650
      %1038 = vmatmul.mubr.bf16.gmra.mrb[0].mxu0 %v649
      %v1039 = vpop.f32.mrb[0].mxu0
      %v1040 = vadd.f32 %v419, %v1039
      %v1041 = vpop.f32.mrb[0].mxu0
      %v1042 = vpop.f32.mrb[0].mxu0
      %v1043 = vadd.f32 %v419, %v1042
      %v1044 = vpop.f32.mrb[0].mxu0
      %1045 = vmatprep.mubr.bf16.mxu0 %v654
      %1046 = vmatmul.mubr.bf16.gmra.mrb[0].mxu0 %v653
      %v1047 = vpop.f32.mrb[0].mxu0
      %v1048 = vadd.f32 %v419, %v1047
      %v1049 = vpop.f32.mrb[0].mxu0
      %v1050 = vpop.f32.mrb[0].mxu0
      %v1051 = vadd.f32 %v419, %v1050
      %v1052 = vpop.f32.mrb[0].mxu0
      %1053 = vmatprep.mubr.bf16.mxu0 %v658
      %1054 = vmatmul.mubr.bf16.gmra.mrb[0].mxu0 %v657
      %v1055 = vpop.f32.mrb[0].mxu0
      %v1056 = vadd.f32 %v419, %v1055
      %v1057 = vpop.f32.mrb[0].mxu0
      %v1058 = vpop.f32.mrb[0].mxu0
      %v1059 = vadd.f32 %v419, %v1058
      %v1060 = vpop.f32.mrb[0].mxu0
      %1061 = vmatprep.mubr.bf16.mxu0 %v662
      %1062 = vmatmul.mubr.bf16.gmra.mrb[0].mxu0 %v661
      %v1063 = vpop.f32.mrb[0].mxu0
      %v1064 = vadd.f32 %v419, %v1063
      %v1065 = vpop.f32.mrb[0].mxu0
      %v1066 = vpop.f32.mrb[0].mxu0
      %v1067 = vadd.f32 %v419, %v1066
      %v1068 = vpop.f32.mrb[0].mxu0
      %1069 = vmatprep.mubr.bf16.mxu0 %v666
      %1070 = vmatmul.mubr.bf16.gmra.mrb[0].mxu0 %v665
      %v1071 = vpop.f32.mrb[0].mxu0
      %v1072 = vadd.f32 %v419, %v1071
      %v1073 = vpop.f32.mrb[0].mxu0
      %v1074 = vpop.f32.mrb[0].mxu0
      %v1075 = vadd.f32 %v419, %v1074
      %v1076 = vpop.f32.mrb[0].mxu0
      %1077 = vmatprep.mubr.bf16.mxu0 %v670
      %1078 = vmatmul.mubr.bf16.gmra.mrb[0].mxu0 %v669
      %v1079 = vpop.f32.mrb[0].mxu0
      %v1080 = vadd.f32 %v419, %v1079
      %v1081 = vpop.f32.mrb[0].mxu0
      %v1082 = vpop.f32.mrb[0].mxu0
      %v1083 = vadd.f32 %v419, %v1082
      %v1084 = vpop.f32.mrb[0].mxu0
      %1085 = vmatprep.mubr.bf16.mxu0 %v674
      %1086 = vmatmul.mubr.bf16.gmra.mrb[0].mxu0 %v673
      %v1087 = vpop.f32.mrb[0].mxu0
      %v1088 = vadd.f32 %v419, %v1087
      %v1089 = vpop.f32.mrb[0].mxu0
      %v1090 = vpop.f32.mrb[0].mxu0
      %v1091 = vadd.f32 %v419, %v1090
      %v1092 = vpop.f32.mrb[0].mxu0
      %1093 = vdwg.mxu0
      %1094 = vmatprep.subr.bf16.mxu0 0
      %1095 = vmatpush1.bf16.msra.mxu0 %v885
      %1096 = vmatprep.subr.bf16.mxu0 0
      %1097 = vmatpush1.bf16.msra.mxu0 %v886
      %1098 = vmatprep.subr.bf16.mxu0 0
      %1099 = vmatpush1.bf16.msra.mxu0 %v887
      %1100 = vmatprep.subr.bf16.mxu0 0
      %1101 = vmatpush1.bf16.msra.mxu0 %v888
      %1102 = vmatprep.subr.bf16.mxu0 0
      %1103 = vmatpush1.bf16.msra.mxu0 %v889
      %1104 = vmatprep.subr.bf16.mxu0 0
      %1105 = vmatpush1.bf16.msra.mxu0 %v890
      %1106 = vmatprep.subr.bf16.mxu0 0
      %1107 = vmatpush1.bf16.msra.mxu0 %v891
      %1108 = vmatprep.subr.bf16.mxu0 0
      %1109 = vmatpush1.bf16.msra.mxu0 %v892
      %1110 = vmatprep.subr.bf16.mxu0 0
      %1111 = vmatpush1.bf16.msra.mxu0 %v893
      %1112 = vmatprep.subr.bf16.mxu0 0
      %1113 = vmatpush1.bf16.msra.mxu0 %v894
      %1114 = vmatprep.subr.bf16.mxu0 0
      %1115 = vmatpush1.bf16.msra.mxu0 %v895
      %1116 = vmatprep.subr.bf16.mxu0 0
      %1117 = vmatpush1.bf16.msra.mxu0 %v896
      %1118 = vmatprep.subr.bf16.mxu0 0
      %1119 = vmatpush1.bf16.msra.mxu0 %v897
      %1120 = vmatprep.subr.bf16.mxu0 0
      %1121 = vmatpush1.bf16.msra.mxu0 %v898
      %1122 = vmatprep.subr.bf16.mxu0 0
      %1123 = vmatpush1.bf16.msra.mxu0 %v899
      %1124 = vmatprep.subr.bf16.mxu0 0
      %1125 = vmatpush1.bf16.msra.mxu0 %v900
      %1126 = vmatprep.mubr.bf16.mxu0 %v616
      %1127 = vmatmul.mubr.bf16.gmra.mrb[0].mxu0 %v615
      %v1128 = vpop.f32.mrb[0].mxu0
      %v1129 = vadd.f32 %v968, %v1128
      %v1130 = vpop.f32.mrb[0].mxu0
      %v1131 = vpop.f32.mrb[0].mxu0
      %v1132 = vadd.f32 %v971, %v1131
      %v1133 = vpop.f32.mrb[0].mxu0
      %1134 = vmatprep.mubr.bf16.mxu0 %v620
      %1135 = vmatmul.mubr.bf16.gmra.mrb[0].mxu0 %v619
      %v1136 = vpop.f32.mrb[0].mxu0
      %v1137 = vadd.f32 %v976, %v1136
      %v1138 = vpop.f32.mrb[0].mxu0
      %v1139 = vpop.f32.mrb[0].mxu0
      %v1140 = vadd.f32 %v979, %v1139
      %v1141 = vpop.f32.mrb[0].mxu0
      %1142 = vmatprep.mubr.bf16.mxu0 %v624
      %1143 = vmatmul.mubr.bf16.gmra.mrb[0].mxu0 %v623
      %v1144 = vpop.f32.mrb[0].mxu0
      %v1145 = vadd.f32 %v984, %v1144
      %v1146 = vpop.f32.mrb[0].mxu0
      %v1147 = vpop.f32.mrb[0].mxu0
      %v1148 = vadd.f32 %v987, %v1147
      %v1149 = vpop.f32.mrb[0].mxu0
      %1150 = vmatprep.mubr.bf16.mxu0 %v628
      %1151 = vmatmul.mubr.bf16.gmra.mrb[0].mxu0 %v627
      %v1152 = vpop.f32.mrb[0].mxu0
      %v1153 = vadd.f32 %v992, %v1152
      %v1154 = vpop.f32.mrb[0].mxu0
      %v1155 = vpop.f32.mrb[0].mxu0
      %v1156 = vadd.f32 %v995, %v1155
      %v1157 = vpop.f32.mrb[0].mxu0
      %1158 = vmatprep.mubr.bf16.mxu0 %v632
      %1159 = vmatmul.mubr.bf16.gmra.mrb[0].mxu0 %v631
      %v1160 = vpop.f32.mrb[0].mxu0
      %v1161 = vadd.f32 %v1000, %v1160
      %v1162 = vpop.f32.mrb[0].mxu0
      %v1163 = vpop.f32.mrb[0].mxu0
      %v1164 = vadd.f32 %v1003, %v1163
      %v1165 = vpop.f32.mrb[0].mxu0
      %1166 = vmatprep.mubr.bf16.mxu0 %v636
      %1167 = vmatmul.mubr.bf16.gmra.mrb[0].mxu0 %v635
      %v1168 = vpop.f32.mrb[0].mxu0
      %v1169 = vadd.f32 %v1008, %v1168
      %v1170 = vpop.f32.mrb[0].mxu0
      %v1171 = vpop.f32.mrb[0].mxu0
      %v1172 = vadd.f32 %v1011, %v1171
      %v1173 = vpop.f32.mrb[0].mxu0
      %1174 = vmatprep.mubr.bf16.mxu0 %v640
      %1175 = vmatmul.mubr.bf16.gmra.mrb[0].mxu0 %v639
      %v1176 = vpop.f32.mrb[0].mxu0
      %v1177 = vadd.f32 %v1016, %v1176
      %v1178 = vpop.f32.mrb[0].mxu0
      %v1179 = vpop.f32.mrb[0].mxu0
      %v1180 = vadd.f32 %v1019, %v1179
      %v1181 = vpop.f32.mrb[0].mxu0
      %1182 = vmatprep.mubr.bf16.mxu0 %v644
      %1183 = vmatmul.mubr.bf16.gmra.mrb[0].mxu0 %v643
      %v1184 = vpop.f32.mrb[0].mxu0
      %v1185 = vadd.f32 %v1024, %v1184
      %v1186 = vpop.f32.mrb[0].mxu0
      %v1187 = vpop.f32.mrb[0].mxu0
      %v1188 = vadd.f32 %v1027, %v1187
      %v1189 = vpop.f32.mrb[0].mxu0
      %1190 = vmatprep.mubr.bf16.mxu0 %v648
      %1191 = vmatmul.mubr.bf16.gmra.mrb[0].mxu0 %v647
      %v1192 = vpop.f32.mrb[0].mxu0
      %v1193 = vadd.f32 %v1032, %v1192
      %v1194 = vpop.f32.mrb[0].mxu0
      %v1195 = vpop.f32.mrb[0].mxu0
      %v1196 = vadd.f32 %v1035, %v1195
      %v1197 = vpop.f32.mrb[0].mxu0
      %1198 = vmatprep.mubr.bf16.mxu0 %v652
      %1199 = vmatmul.mubr.bf16.gmra.mrb[0].mxu0 %v651
      %v1200 = vpop.f32.mrb[0].mxu0
      %v1201 = vadd.f32 %v1040, %v1200
      %v1202 = vpop.f32.mrb[0].mxu0
      %v1203 = vpop.f32.mrb[0].mxu0
      %v1204 = vadd.f32 %v1043, %v1203
      %v1205 = vpop.f32.mrb[0].mxu0
      %1206 = vmatprep.mubr.bf16.mxu0 %v656
      %1207 = vmatmul.mubr.bf16.gmra.mrb[0].mxu0 %v655
      %v1208 = vpop.f32.mrb[0].mxu0
      %v1209 = vadd.f32 %v1048, %v1208
      %v1210 = vpop.f32.mrb[0].mxu0
      %v1211 = vpop.f32.mrb[0].mxu0
      %v1212 = vadd.f32 %v1051, %v1211
      %v1213 = vpop.f32.mrb[0].mxu0
      %1214 = vmatprep.mubr.bf16.mxu0 %v660
      %1215 = vmatmul.mubr.bf16.gmra.mrb[0].mxu0 %v659
      %v1216 = vpop.f32.mrb[0].mxu0
      %v1217 = vadd.f32 %v1056, %v1216
      %v1218 = vpop.f32.mrb[0].mxu0
      %v1219 = vpop.f32.mrb[0].mxu0
      %v1220 = vadd.f32 %v1059, %v1219
      %v1221 = vpop.f32.mrb[0].mxu0
      %1222 = vmatprep.mubr.bf16.mxu0 %v664
      %1223 = vmatmul.mubr.bf16.gmra.mrb[0].mxu0 %v663
      %v1224 = vpop.f32.mrb[0].mxu0
      %v1225 = vadd.f32 %v1064, %v1224
      %v1226 = vpop.f32.mrb[0].mxu0
      %v1227 = vpop.f32.mrb[0].mxu0
      %v1228 = vadd.f32 %v1067, %v1227
      %v1229 = vpop.f32.mrb[0].mxu0
      %1230 = vmatprep.mubr.bf16.mxu0 %v668
      %1231 = vmatmul.mubr.bf16.gmra.mrb[0].mxu0 %v667
      %v1232 = vpop.f32.mrb[0].mxu0
      %v1233 = vadd.f32 %v1072, %v1232
      %v1234 = vpop.f32.mrb[0].mxu0
      %v1235 = vpop.f32.mrb[0].mxu0
      %v1236 = vadd.f32 %v1075, %v1235
      %v1237 = vpop.f32.mrb[0].mxu0
      %1238 = vmatprep.mubr.bf16.mxu0 %v672
      %1239 = vmatmul.mubr.bf16.gmra.mrb[0].mxu0 %v671
      %v1240 = vpop.f32.mrb[0].mxu0
      %v1241 = vadd.f32 %v1080, %v1240
      %v1242 = vpop.f32.mrb[0].mxu0
      %v1243 = vpop.f32.mrb[0].mxu0
      %v1244 = vadd.f32 %v1083, %v1243
      %v1245 = vpop.f32.mrb[0].mxu0
      %1246 = vmatprep.mubr.bf16.mxu0 %v676
      %1247 = vmatmul.mubr.bf16.gmra.mrb[0].mxu0 %v675
      %v1248 = vpop.f32.mrb[0].mxu0
      %v1249 = vadd.f32 %v1088, %v1248
      %v1250 = vpop.f32.mrb[0].mxu0
      %v1251 = vpop.f32.mrb[0].mxu0
      %v1252 = vadd.f32 %v1091, %v1251
      %v1253 = vpop.f32.mrb[0].mxu0
      %1254 = vdwg.mxu0
      %v1255 = vmax.f32 %v1129, 0.0
      %v1256 = vmax.f32 %v1132, 0.0
      %v1257 = vmax.f32 %v1137, 0.0
      %v1258 = vmax.f32 %v1140, 0.0
      %v1259 = vmax.f32 %v1145, 0.0
      %v1260 = vmax.f32 %v1148, 0.0
      %v1261 = vmax.f32 %v1153, 0.0
      %v1262 = vmax.f32 %v1156, 0.0
      %v1263 = vmax.f32 %v1161, 0.0
      %v1264 = vmax.f32 %v1164, 0.0
      %v1265 = vmax.f32 %v1169, 0.0
      %v1266 = vmax.f32 %v1172, 0.0
      %v1267 = vmax.f32 %v1177, 0.0
      %v1268 = vmax.f32 %v1180, 0.0
      %v1269 = vmax.f32 %v1185, 0.0
      %v1270 = vmax.f32 %v1188, 0.0
      %v1271 = vmax.f32 %v1193, 0.0
      %v1272 = vmax.f32 %v1196, 0.0
      %v1273 = vmax.f32 %v1201, 0.0
      %v1274 = vmax.f32 %v1204, 0.0
      %v1275 = vmax.f32 %v1209, 0.0
      %v1276 = vmax.f32 %v1212, 0.0
      %v1277 = vmax.f32 %v1217, 0.0
      %v1278 = vmax.f32 %v1220, 0.0
      %v1279 = vmax.f32 %v1225, 0.0
      %v1280 = vmax.f32 %v1228, 0.0
      %v1281 = vmax.f32 %v1233, 0.0
      %v1282 = vmax.f32 %v1236, 0.0
      %v1283 = vmax.f32 %v1241, 0.0
      %v1284 = vmax.f32 %v1244, 0.0
      %v1285 = vmax.f32 %v1249, 0.0
      %v1286 = vmax.f32 %v1252, 0.0
      %v1287 = vpack.c.bf16 %v1256, %v1255
      %v1288 = vpack.c.bf16 %v1258, %v1257
      %v1289 = vpack.c.bf16 %v1260, %v1259
      %v1290 = vpack.c.bf16 %v1262, %v1261
      %v1291 = vpack.c.bf16 %v1264, %v1263
      %v1292 = vpack.c.bf16 %v1266, %v1265
      %v1293 = vpack.c.bf16 %v1268, %v1267
      %v1294 = vpack.c.bf16 %v1270, %v1269
      %v1295 = vpack.c.bf16 %v1272, %v1271
      %v1296 = vpack.c.bf16 %v1274, %v1273
      %v1297 = vpack.c.bf16 %v1276, %v1275
      %v1298 = vpack.c.bf16 %v1278, %v1277
      %v1299 = vpack.c.bf16 %v1280, %v1279
      %v1300 = vpack.c.bf16 %v1282, %v1281
      %v1301 = vpack.c.bf16 %v1284, %v1283
      %v1302 = vpack.c.bf16 %v1286, %v1285
      %v1303 = vld [vmem:[%s3] sm:$0xf]
      %v1304 = vld [vmem:[%s3 + $0x4] sm:$0xf]
      %v1305 = vld [vmem:[%s3 + $0x8] sm:$0xf]
      %v1306 = vld [vmem:[%s3 + $0xc] sm:$0xf]
      %v1307 = vld [vmem:[%s3 + $0x10] sm:$0xf]
      %v1308 = vld [vmem:[%s3 + $0x14] sm:$0xf]
      %v1309 = vld [vmem:[%s3 + $0x18] sm:$0xf]
      %v1310 = vld [vmem:[%s3 + $0x1c] sm:$0xf]
      %v1311 = vld [vmem:[%s3 + $0x20] sm:$0xf]
      %v1312 = vld [vmem:[%s3 + $0x24] sm:$0xf]
      %v1313 = vld [vmem:[%s3 + $0x28] sm:$0xf]
      %v1314 = vld [vmem:[%s3 + $0x2c] sm:$0xf]
      %v1315 = vld [vmem:[%s3 + $0x30] sm:$0xf]
      %v1316 = vld [vmem:[%s3 + $0x34] sm:$0xf]
      %v1317 = vld [vmem:[%s3 + $0x38] sm:$0xf]
      %v1318 = vld [vmem:[%s3 + $0x3c] sm:$0xf]
      %v1319 = vld [vmem:[%s4] sm:$0x1]
      %v1321 = vlaneseq
      %v1322 = vshrl.u32 %v1321, 7
      %v1323 = vsub.s32 0, %v1322
      %v1324 = vrot.slane %v1319, %v1323
      %v1342 = vunpack.c.l.b16 %v1303
      %v1343 = vunpack.c.l.b16 %v1304
      %v1344 = vunpack.c.l.b16 %v1305
      %v1345 = vunpack.c.l.b16 %v1306
      %v1346 = vunpack.c.l.b16 %v1307
      %v1347 = vunpack.c.l.b16 %v1308
      %v1348 = vunpack.c.l.b16 %v1309
      %v1349 = vunpack.c.l.b16 %v1310
      %v1350 = vunpack.c.l.b16 %v1311
      %v1351 = vunpack.c.l.b16 %v1312
      %v1352 = vunpack.c.l.b16 %v1313
      %v1353 = vunpack.c.l.b16 %v1314
      %v1354 = vunpack.c.l.b16 %v1315
      %v1355 = vunpack.c.l.b16 %v1316
      %v1356 = vunpack.c.l.b16 %v1317
      %v1357 = vunpack.c.l.b16 %v1318
      %v1358 = vpack.c.b16 %v1343, %v1342
      %v1359 = vpack.c.b16 %v1345, %v1344
      %v1360 = vpack.c.b16 %v1347, %v1346
      %v1361 = vpack.c.b16 %v1349, %v1348
      %v1362 = vpack.c.b16 %v1351, %v1350
      %v1363 = vpack.c.b16 %v1353, %v1352
      %v1364 = vpack.c.b16 %v1355, %v1354
      %v1365 = vpack.c.b16 %v1357, %v1356
      %1374 = vmatprep.subr.bf16.mxu0 0
      %1375 = vmatpush1.bf16.msra.mxu0 %v1358
      %1376 = vmatprep.subr.bf16.mxu0 0
      %1377 = vmatpush1.bf16.msra.mxu0 %v1359
      %1378 = vmatprep.subr.bf16.mxu0 0
      %1379 = vmatpush1.bf16.msra.mxu0 %v1360
      %1380 = vmatprep.subr.bf16.mxu0 0
      %1381 = vmatpush1.bf16.msra.mxu0 %v1361
      %1382 = vmatprep.subr.bf16.mxu0 0
      %1383 = vmatpush1.bf16.msra.mxu0 %v1362
      %1384 = vmatprep.subr.bf16.mxu0 0
      %1385 = vmatpush1.bf16.msra.mxu0 %v1363
      %1386 = vmatprep.subr.bf16.mxu0 0
      %1387 = vmatpush1.bf16.msra.mxu0 %v1364
      %1388 = vmatprep.subr.bf16.mxu0 0
      %1389 = vmatpush1.bf16.msra.mxu0 %v1365
      %1390 = vmatprep.subr.bf16.mxu0 0
      %1391 = vmatpush1.bf16.msra.mxu0 0
      %1392 = vmatprep.subr.bf16.mxu0 0
      %1393 = vmatpush1.bf16.msra.mxu0 0
      %1394 = vmatprep.subr.bf16.mxu0 0
      %1395 = vmatpush1.bf16.msra.mxu0 0
      %1396 = vmatprep.subr.bf16.mxu0 0
      %1397 = vmatpush1.bf16.msra.mxu0 0
      %1398 = vmatprep.subr.bf16.mxu0 0
      %1399 = vmatpush1.bf16.msra.mxu0 0
      %1400 = vmatprep.subr.bf16.mxu0 0
      %1401 = vmatpush1.bf16.msra.mxu0 0
      %1402 = vmatprep.subr.bf16.mxu0 0
      %1403 = vmatpush1.bf16.msra.mxu0 0
      %1404 = vmatprep.subr.bf16.mxu0 0
      %1405 = vmatpush1.bf16.msra.mxu0 0
      %1406 = vmatprep.mubr.bf16.mxu0 0
      %1407 = vmatmul.mubr.bf16.gmra.mrb[0].mxu0 %v1287
      %v1408 = vpop.f32.mrb[0].mxu0
      %v1409 = vadd.f32 %v1324, %v1408
      %v1410 = vpop.f32.mrb[0].mxu0
      %v1411 = vpop.f32.mrb[0].mxu0
      %v1412 = vadd.f32 %v1324, %v1411
      %v1413 = vpop.f32.mrb[0].mxu0
      %1414 = vmatprep.mubr.bf16.mxu0 0
      %1415 = vmatmul.mubr.bf16.gmra.mrb[0].mxu0 %v1288
      %v1416 = vpop.f32.mrb[0].mxu0
      %v1417 = vadd.f32 %v1324, %v1416
      %v1418 = vpop.f32.mrb[0].mxu0
      %v1419 = vpop.f32.mrb[0].mxu0
      %v1420 = vadd.f32 %v1324, %v1419
      %v1421 = vpop.f32.mrb[0].mxu0
      %1422 = vmatprep.mubr.bf16.mxu0 0
      %1423 = vmatmul.mubr.bf16.gmra.mrb[0].mxu0 %v1289
      %v1424 = vpop.f32.mrb[0].mxu0
      %v1425 = vadd.f32 %v1324, %v1424
      %v1426 = vpop.f32.mrb[0].mxu0
      %v1427 = vpop.f32.mrb[0].mxu0
      %v1428 = vadd.f32 %v1324, %v1427
      %v1429 = vpop.f32.mrb[0].mxu0
      %1430 = vmatprep.mubr.bf16.mxu0 0
      %1431 = vmatmul.mubr.bf16.gmra.mrb[0].mxu0 %v1290
      %v1432 = vpop.f32.mrb[0].mxu0
      %v1433 = vadd.f32 %v1324, %v1432
      %v1434 = vpop.f32.mrb[0].mxu0
      %v1435 = vpop.f32.mrb[0].mxu0
      %v1436 = vadd.f32 %v1324, %v1435
      %v1437 = vpop.f32.mrb[0].mxu0
      %1438 = vmatprep.mubr.bf16.mxu0 0
      %1439 = vmatmul.mubr.bf16.gmra.mrb[0].mxu0 %v1291
      %v1440 = vpop.f32.mrb[0].mxu0
      %v1441 = vadd.f32 %v1324, %v1440
      %v1442 = vpop.f32.mrb[0].mxu0
      %v1443 = vpop.f32.mrb[0].mxu0
      %v1444 = vadd.f32 %v1324, %v1443
      %v1445 = vpop.f32.mrb[0].mxu0
      %1446 = vmatprep.mubr.bf16.mxu0 0
      %1447 = vmatmul.mubr.bf16.gmra.mrb[0].mxu0 %v1292
      %v1448 = vpop.f32.mrb[0].mxu0
      %v1449 = vadd.f32 %v1324, %v1448
      %v1450 = vpop.f32.mrb[0].mxu0
      %v1451 = vpop.f32.mrb[0].mxu0
      %v1452 = vadd.f32 %v1324, %v1451
      %v1453 = vpop.f32.mrb[0].mxu0
      %1454 = vmatprep.mubr.bf16.mxu0 0
      %1455 = vmatmul.mubr.bf16.gmra.mrb[0].mxu0 %v1293
      %v1456 = vpop.f32.mrb[0].mxu0
      %v1457 = vadd.f32 %v1324, %v1456
      %v1458 = vpop.f32.mrb[0].mxu0
      %v1459 = vpop.f32.mrb[0].mxu0
      %v1460 = vadd.f32 %v1324, %v1459
      %v1461 = vpop.f32.mrb[0].mxu0
      %1462 = vmatprep.mubr.bf16.mxu0 0
      %1463 = vmatmul.mubr.bf16.gmra.mrb[0].mxu0 %v1294
      %v1464 = vpop.f32.mrb[0].mxu0
      %v1465 = vadd.f32 %v1324, %v1464
      %v1466 = vpop.f32.mrb[0].mxu0
      %v1467 = vpop.f32.mrb[0].mxu0
      %v1468 = vadd.f32 %v1324, %v1467
      %v1469 = vpop.f32.mrb[0].mxu0
      %1470 = vmatprep.mubr.bf16.mxu0 0
      %1471 = vmatmul.mubr.bf16.gmra.mrb[0].mxu0 %v1295
      %v1472 = vpop.f32.mrb[0].mxu0
      %v1473 = vadd.f32 %v1324, %v1472
      %v1474 = vpop.f32.mrb[0].mxu0
      %v1475 = vpop.f32.mrb[0].mxu0
      %v1476 = vadd.f32 %v1324, %v1475
      %v1477 = vpop.f32.mrb[0].mxu0
      %1478 = vmatprep.mubr.bf16.mxu0 0
      %1479 = vmatmul.mubr.bf16.gmra.mrb[0].mxu0 %v1296
      %v1480 = vpop.f32.mrb[0].mxu0
      %v1481 = vadd.f32 %v1324, %v1480
      %v1482 = vpop.f32.mrb[0].mxu0
      %v1483 = vpop.f32.mrb[0].mxu0
      %v1484 = vadd.f32 %v1324, %v1483
      %v1485 = vpop.f32.mrb[0].mxu0
      %1486 = vmatprep.mubr.bf16.mxu0 0
      %1487 = vmatmul.mubr.bf16.gmra.mrb[0].mxu0 %v1297
      %v1488 = vpop.f32.mrb[0].mxu0
      %v1489 = vadd.f32 %v1324, %v1488
      %v1490 = vpop.f32.mrb[0].mxu0
      %v1491 = vpop.f32.mrb[0].mxu0
      %v1492 = vadd.f32 %v1324, %v1491
      %v1493 = vpop.f32.mrb[0].mxu0
      %1494 = vmatprep.mubr.bf16.mxu0 0
      %1495 = vmatmul.mubr.bf16.gmra.mrb[0].mxu0 %v1298
      %v1496 = vpop.f32.mrb[0].mxu0
      %v1497 = vadd.f32 %v1324, %v1496
      %v1498 = vpop.f32.mrb[0].mxu0
      %v1499 = vpop.f32.mrb[0].mxu0
      %v1500 = vadd.f32 %v1324, %v1499
      %v1501 = vpop.f32.mrb[0].mxu0
      %1502 = vmatprep.mubr.bf16.mxu0 0
      %1503 = vmatmul.mubr.bf16.gmra.mrb[0].mxu0 %v1299
      %v1504 = vpop.f32.mrb[0].mxu0
      %v1505 = vadd.f32 %v1324, %v1504
      %v1506 = vpop.f32.mrb[0].mxu0
      %v1507 = vpop.f32.mrb[0].mxu0
      %v1508 = vadd.f32 %v1324, %v1507
      %v1509 = vpop.f32.mrb[0].mxu0
      %1510 = vmatprep.mubr.bf16.mxu0 0
      %1511 = vmatmul.mubr.bf16.gmra.mrb[0].mxu0 %v1300
      %v1512 = vpop.f32.mrb[0].mxu0
      %v1513 = vadd.f32 %v1324, %v1512
      %v1514 = vpop.f32.mrb[0].mxu0
      %v1515 = vpop.f32.mrb[0].mxu0
      %v1516 = vadd.f32 %v1324, %v1515
      %v1517 = vpop.f32.mrb[0].mxu0
      %1518 = vmatprep.mubr.bf16.mxu0 0
      %1519 = vmatmul.mubr.bf16.gmra.mrb[0].mxu0 %v1301
      %v1520 = vpop.f32.mrb[0].mxu0
      %v1521 = vadd.f32 %v1324, %v1520
      %v1522 = vpop.f32.mrb[0].mxu0
      %v1523 = vpop.f32.mrb[0].mxu0
      %v1524 = vadd.f32 %v1324, %v1523
      %v1525 = vpop.f32.mrb[0].mxu0
      %1526 = vmatprep.mubr.bf16.mxu0 0
      %1527 = vmatmul.mubr.bf16.gmra.mrb[0].mxu0 %v1302
      %v1528 = vpop.f32.mrb[0].mxu0
      %v1529 = vadd.f32 %v1324, %v1528
      %v1530 = vpop.f32.mrb[0].mxu0
      %v1531 = vpop.f32.mrb[0].mxu0
      %v1532 = vadd.f32 %v1324, %v1531
      %v1533 = vpop.f32.mrb[0].mxu0
      %1534 = vdwg.mxu0
      %v1535 = vmax.f32 %v1409, 0.0
      %v1536 = vmax.f32 %v1412, 0.0
      %v1537 = vmax.f32 %v1417, 0.0
      %v1538 = vmax.f32 %v1420, 0.0
      %v1539 = vmax.f32 %v1425, 0.0
      %v1540 = vmax.f32 %v1428, 0.0
      %v1541 = vmax.f32 %v1433, 0.0
      %v1542 = vmax.f32 %v1436, 0.0
      %v1543 = vmax.f32 %v1441, 0.0
      %v1544 = vmax.f32 %v1444, 0.0
      %v1545 = vmax.f32 %v1449, 0.0
      %v1546 = vmax.f32 %v1452, 0.0
      %v1547 = vmax.f32 %v1457, 0.0
      %v1548 = vmax.f32 %v1460, 0.0
      %v1549 = vmax.f32 %v1465, 0.0
      %v1550 = vmax.f32 %v1468, 0.0
      %v1551 = vmax.f32 %v1473, 0.0
      %v1552 = vmax.f32 %v1476, 0.0
      %v1553 = vmax.f32 %v1481, 0.0
      %v1554 = vmax.f32 %v1484, 0.0
      %v1555 = vmax.f32 %v1489, 0.0
      %v1556 = vmax.f32 %v1492, 0.0
      %v1557 = vmax.f32 %v1497, 0.0
      %v1558 = vmax.f32 %v1500, 0.0
      %v1559 = vmax.f32 %v1505, 0.0
      %v1560 = vmax.f32 %v1508, 0.0
      %v1561 = vmax.f32 %v1513, 0.0
      %v1562 = vmax.f32 %v1516, 0.0
      %v1563 = vmax.f32 %v1521, 0.0
      %v1564 = vmax.f32 %v1524, 0.0
      %v1565 = vmax.f32 %v1529, 0.0
      %v1566 = vmax.f32 %v1532, 0.0
      %v1567 = vpack.c.bf16 %v1536, %v1535
      %v1568 = vpack.c.bf16 %v1538, %v1537
      %v1569 = vpack.c.bf16 %v1540, %v1539
      %v1570 = vpack.c.bf16 %v1542, %v1541
      %v1571 = vpack.c.bf16 %v1544, %v1543
      %v1572 = vpack.c.bf16 %v1546, %v1545
      %v1573 = vpack.c.bf16 %v1548, %v1547
      %v1574 = vpack.c.bf16 %v1550, %v1549
      %v1575 = vpack.c.bf16 %v1552, %v1551
      %v1576 = vpack.c.bf16 %v1554, %v1553
      %v1577 = vpack.c.bf16 %v1556, %v1555
      %v1578 = vpack.c.bf16 %v1558, %v1557
      %v1579 = vpack.c.bf16 %v1560, %v1559
      %v1580 = vpack.c.bf16 %v1562, %v1561
      %v1581 = vpack.c.bf16 %v1564, %v1563
      %v1582 = vpack.c.bf16 %v1566, %v1565
      %v1583 = vld [vmem:[%s5] sm:$0xf]
      %v1584 = vld [vmem:[%s5 + $0x4] sm:$0xf]
      %v1585 = vld [vmem:[%s5 + $0x8] sm:$0xf]
      %v1586 = vld [vmem:[%s5 + $0xc] sm:$0xf]
      %v1587 = vld [vmem:[%s5 + $0x10] sm:$0xf]
      %v1588 = vld [vmem:[%s5 + $0x14] sm:$0xf]
      %v1589 = vld [vmem:[%s5 + $0x18] sm:$0xf]
      %v1590 = vld [vmem:[%s5 + $0x1c] sm:$0xf]
      %v1591 = vld [vmem:[%s6] sm:$0x1]
      %v1593 = vlaneseq
      %v1594 = vshrl.u32 %v1593, 7
      %v1595 = vsub.s32 0, %v1594
      %v1596 = vrot.slane %v1591, %v1595
      %v1606 = vunpack.c.l.b16 %v1583
      %v1607 = vunpack.c.l.b16 %v1584
      %v1608 = vunpack.c.l.b16 %v1585
      %v1609 = vunpack.c.l.b16 %v1586
      %v1610 = vunpack.c.l.b16 %v1587
      %v1611 = vunpack.c.l.b16 %v1588
      %v1612 = vunpack.c.l.b16 %v1589
      %v1613 = vunpack.c.l.b16 %v1590
      %v1614 = vpack.c.b16 %v1607, %v1606
      %v1615 = vpack.c.b16 %v1609, %v1608
      %v1616 = vpack.c.b16 %v1611, %v1610
      %v1617 = vpack.c.b16 %v1613, %v1612
      %vm1622 = vcmask 523264
      %v1624 = vsel %vm1622, %v1567, 0
      %v1627 = vsel %vm1622, %v1568, 0
      %v1630 = vsel %vm1622, %v1569, 0
      %v1633 = vsel %vm1622, %v1570, 0
      %v1636 = vsel %vm1622, %v1571, 0
      %v1639 = vsel %vm1622, %v1572, 0
      %v1642 = vsel %vm1622, %v1573, 0
      %v1645 = vsel %vm1622, %v1574, 0
      %v1648 = vsel %vm1622, %v1575, 0
      %v1651 = vsel %vm1622, %v1576, 0
      %v1654 = vsel %vm1622, %v1577, 0
      %v1657 = vsel %vm1622, %v1578, 0
      %v1660 = vsel %vm1622, %v1579, 0
      %v1663 = vsel %vm1622, %v1580, 0
      %v1666 = vsel %vm1622, %v1581, 0
      %v1669 = vsel %vm1622, %v1582, 0
      %1671 = vmatprep.subr.bf16.mxu0 0
      %1672 = vmatpush1.bf16.msra.mxu0 %v1614
      %1673 = vmatprep.subr.bf16.mxu0 0
      %1674 = vmatpush1.bf16.msra.mxu0 %v1615
      %1675 = vmatprep.subr.bf16.mxu0 0
      %1676 = vmatpush1.bf16.msra.mxu0 %v1616
      %1677 = vmatprep.subr.bf16.mxu0 0
      %1678 = vmatpush1.bf16.msra.mxu0 %v1617
      %1679 = vmatprep.subr.bf16.mxu0 0
      %1680 = vmatpush1.bf16.msra.mxu0 0
      %1681 = vmatprep.subr.bf16.mxu0 0
      %1682 = vmatpush1.bf16.msra.mxu0 0
      %1683 = vmatprep.subr.bf16.mxu0 0
      %1684 = vmatpush1.bf16.msra.mxu0 0
      %1685 = vmatprep.subr.bf16.mxu0 0
      %1686 = vmatpush1.bf16.msra.mxu0 0
      %1687 = vmatprep.subr.bf16.mxu0 0
      %1688 = vmatpush1.bf16.msra.mxu0 0
      %1689 = vmatprep.subr.bf16.mxu0 0
      %1690 = vmatpush1.bf16.msra.mxu0 0
      %1691 = vmatprep.subr.bf16.mxu0 0
      %1692 = vmatpush1.bf16.msra.mxu0 0
      %1693 = vmatprep.subr.bf16.mxu0 0
      %1694 = vmatpush1.bf16.msra.mxu0 0
      %1695 = vmatprep.subr.bf16.mxu0 0
      %1696 = vmatpush1.bf16.msra.mxu0 0
      %1697 = vmatprep.subr.bf16.mxu0 0
      %1698 = vmatpush1.bf16.msra.mxu0 0
      %1699 = vmatprep.subr.bf16.mxu0 0
      %1700 = vmatpush1.bf16.msra.mxu0 0
      %1701 = vmatprep.subr.bf16.mxu0 0
      %1702 = vmatpush1.bf16.msra.mxu0 0
      %1703 = vmatprep.mubr.bf16.mxu0 0
      %1704 = vmatmul.mubr.bf16.gmra.mrb[0].mxu0 %v1624
      %v1705 = vpop.f32.mrb[0].mxu0
      %v1706 = vadd.f32 %v1596, %v1705
      %v1707 = vpop.f32.mrb[0].mxu0
      %v1708 = vpop.f32.mrb[0].mxu0
      %v1709 = vadd.f32 %v1596, %v1708
      %v1710 = vpop.f32.mrb[0].mxu0
      %1711 = vmatprep.mubr.bf16.mxu0 0
      %1712 = vmatmul.mubr.bf16.gmra.mrb[0].mxu0 %v1627
      %v1713 = vpop.f32.mrb[0].mxu0
      %v1714 = vadd.f32 %v1596, %v1713
      %v1715 = vpop.f32.mrb[0].mxu0
      %v1716 = vpop.f32.mrb[0].mxu0
      %v1717 = vadd.f32 %v1596, %v1716
      %v1718 = vpop.f32.mrb[0].mxu0
      %1719 = vmatprep.mubr.bf16.mxu0 0
      %1720 = vmatmul.mubr.bf16.gmra.mrb[0].mxu0 %v1630
      %v1721 = vpop.f32.mrb[0].mxu0
      %v1722 = vadd.f32 %v1596, %v1721
      %v1723 = vpop.f32.mrb[0].mxu0
      %v1724 = vpop.f32.mrb[0].mxu0
      %v1725 = vadd.f32 %v1596, %v1724
      %v1726 = vpop.f32.mrb[0].mxu0
      %1727 = vmatprep.mubr.bf16.mxu0 0
      %1728 = vmatmul.mubr.bf16.gmra.mrb[0].mxu0 %v1633
      %v1729 = vpop.f32.mrb[0].mxu0
      %v1730 = vadd.f32 %v1596, %v1729
      %v1731 = vpop.f32.mrb[0].mxu0
      %v1732 = vpop.f32.mrb[0].mxu0
      %v1733 = vadd.f32 %v1596, %v1732
      %v1734 = vpop.f32.mrb[0].mxu0
      %1735 = vmatprep.mubr.bf16.mxu0 0
      %1736 = vmatmul.mubr.bf16.gmra.mrb[0].mxu0 %v1636
      %v1737 = vpop.f32.mrb[0].mxu0
      %v1738 = vadd.f32 %v1596, %v1737
      %v1739 = vpop.f32.mrb[0].mxu0
      %v1740 = vpop.f32.mrb[0].mxu0
      %v1741 = vadd.f32 %v1596, %v1740
      %v1742 = vpop.f32.mrb[0].mxu0
      %1743 = vmatprep.mubr.bf16.mxu0 0
      %1744 = vmatmul.mubr.bf16.gmra.mrb[0].mxu0 %v1639
      %v1745 = vpop.f32.mrb[0].mxu0
      %v1746 = vadd.f32 %v1596, %v1745
      %v1747 = vpop.f32.mrb[0].mxu0
      %v1748 = vpop.f32.mrb[0].mxu0
      %v1749 = vadd.f32 %v1596, %v1748
      %v1750 = vpop.f32.mrb[0].mxu0
      %1751 = vmatprep.mubr.bf16.mxu0 0
      %1752 = vmatmul.mubr.bf16.gmra.mrb[0].mxu0 %v1642
      %v1753 = vpop.f32.mrb[0].mxu0
      %v1754 = vadd.f32 %v1596, %v1753
      %v1755 = vpop.f32.mrb[0].mxu0
      %v1756 = vpop.f32.mrb[0].mxu0
      %v1757 = vadd.f32 %v1596, %v1756
      %v1758 = vpop.f32.mrb[0].mxu0
      %1759 = vmatprep.mubr.bf16.mxu0 0
      %1760 = vmatmul.mubr.bf16.gmra.mrb[0].mxu0 %v1645
      %v1761 = vpop.f32.mrb[0].mxu0
      %v1762 = vadd.f32 %v1596, %v1761
      %v1763 = vpop.f32.mrb[0].mxu0
      %v1764 = vpop.f32.mrb[0].mxu0
      %v1765 = vadd.f32 %v1596, %v1764
      %v1766 = vpop.f32.mrb[0].mxu0
      %1767 = vmatprep.mubr.bf16.mxu0 0
      %1768 = vmatmul.mubr.bf16.gmra.mrb[0].mxu0 %v1648
      %v1769 = vpop.f32.mrb[0].mxu0
      %v1770 = vadd.f32 %v1596, %v1769
      %v1771 = vpop.f32.mrb[0].mxu0
      %v1772 = vpop.f32.mrb[0].mxu0
      %v1773 = vadd.f32 %v1596, %v1772
      %v1774 = vpop.f32.mrb[0].mxu0
      %1775 = vmatprep.mubr.bf16.mxu0 0
      %1776 = vmatmul.mubr.bf16.gmra.mrb[0].mxu0 %v1651
      %v1777 = vpop.f32.mrb[0].mxu0
      %v1778 = vadd.f32 %v1596, %v1777
      %v1779 = vpop.f32.mrb[0].mxu0
      %v1780 = vpop.f32.mrb[0].mxu0
      %v1781 = vadd.f32 %v1596, %v1780
      %v1782 = vpop.f32.mrb[0].mxu0
      %1783 = vmatprep.mubr.bf16.mxu0 0
      %1784 = vmatmul.mubr.bf16.gmra.mrb[0].mxu0 %v1654
      %v1785 = vpop.f32.mrb[0].mxu0
      %v1786 = vadd.f32 %v1596, %v1785
      %v1787 = vpop.f32.mrb[0].mxu0
      %v1788 = vpop.f32.mrb[0].mxu0
      %v1789 = vadd.f32 %v1596, %v1788
      %v1790 = vpop.f32.mrb[0].mxu0
      %1791 = vmatprep.mubr.bf16.mxu0 0
      %1792 = vmatmul.mubr.bf16.gmra.mrb[0].mxu0 %v1657
      %v1793 = vpop.f32.mrb[0].mxu0
      %v1794 = vadd.f32 %v1596, %v1793
      %v1795 = vpop.f32.mrb[0].mxu0
      %v1796 = vpop.f32.mrb[0].mxu0
      %v1797 = vadd.f32 %v1596, %v1796
      %v1798 = vpop.f32.mrb[0].mxu0
      %1799 = vmatprep.mubr.bf16.mxu0 0
      %1800 = vmatmul.mubr.bf16.gmra.mrb[0].mxu0 %v1660
      %v1801 = vpop.f32.mrb[0].mxu0
      %v1802 = vadd.f32 %v1596, %v1801
      %v1803 = vpop.f32.mrb[0].mxu0
      %v1804 = vpop.f32.mrb[0].mxu0
      %v1805 = vadd.f32 %v1596, %v1804
      %v1806 = vpop.f32.mrb[0].mxu0
      %1807 = vmatprep.mubr.bf16.mxu0 0
      %1808 = vmatmul.mubr.bf16.gmra.mrb[0].mxu0 %v1663
      %v1809 = vpop.f32.mrb[0].mxu0
      %v1810 = vadd.f32 %v1596, %v1809
      %v1811 = vpop.f32.mrb[0].mxu0
      %v1812 = vpop.f32.mrb[0].mxu0
      %v1813 = vadd.f32 %v1596, %v1812
      %v1814 = vpop.f32.mrb[0].mxu0
      %1815 = vmatprep.mubr.bf16.mxu0 0
      %1816 = vmatmul.mubr.bf16.gmra.mrb[0].mxu0 %v1666
      %v1817 = vpop.f32.mrb[0].mxu0
      %v1818 = vadd.f32 %v1596, %v1817
      %v1819 = vpop.f32.mrb[0].mxu0
      %v1820 = vpop.f32.mrb[0].mxu0
      %v1821 = vadd.f32 %v1596, %v1820
      %v1822 = vpop.f32.mrb[0].mxu0
      %1823 = vmatprep.mubr.bf16.mxu0 0
      %1824 = vmatmul.mubr.bf16.gmra.mrb[0].mxu0 %v1669
      %v1825 = vpop.f32.mrb[0].mxu0
      %v1826 = vadd.f32 %v1596, %v1825
      %v1827 = vpop.f32.mrb[0].mxu0
      %v1828 = vpop.f32.mrb[0].mxu0
      %v1829 = vadd.f32 %v1596, %v1828
      %v1830 = vpop.f32.mrb[0].mxu0
      %1831 = vdwg.mxu0
      %1832 = vst [vmem:[%s283] sm:$0xff] %v1706
      %1833 = vst [vmem:[%s283 + $0x8] sm:$0xff] %v1709
      %1834 = vst [vmem:[%s283 + $0x10] sm:$0xff] %v1714
      %1835 = vst [vmem:[%s283 + $0x18] sm:$0xff] %v1717
      %1836 = vst [vmem:[%s283 + $0x20] sm:$0xff] %v1722
      %1837 = vst [vmem:[%s283 + $0x28] sm:$0xff] %v1725
      %1838 = vst [vmem:[%s283 + $0x30] sm:$0xff] %v1730
      %1839 = vst [vmem:[%s283 + $0x38] sm:$0xff] %v1733
      %1840 = vst [vmem:[%s283 + $0x40] sm:$0xff] %v1738
      %1841 = vst [vmem:[%s283 + $0x48] sm:$0xff] %v1741
      %1842 = vst [vmem:[%s283 + $0x50] sm:$0xff] %v1746
      %1843 = vst [vmem:[%s283 + $0x58] sm:$0xff] %v1749
      %1844 = vst [vmem:[%s283 + $0x60] sm:$0xff] %v1754
      %1845 = vst [vmem:[%s283 + $0x68] sm:$0xff] %v1757
      %1846 = vst [vmem:[%s283 + $0x70] sm:$0xff] %v1762
      %1847 = vst [vmem:[%s283 + $0x78] sm:$0xff] %v1765
      %1848 = vst [vmem:[%s283 + $0x80] sm:$0xff] %v1770
      %1849 = vst [vmem:[%s283 + $0x88] sm:$0xff] %v1773
      %1850 = vst [vmem:[%s283 + $0x90] sm:$0xff] %v1778
      %1851 = vst [vmem:[%s283 + $0x98] sm:$0xff] %v1781
      %1852 = vst [vmem:[%s283 + $0xa0] sm:$0xff] %v1786
      %1853 = vst [vmem:[%s283 + $0xa8] sm:$0xff] %v1789
      %1854 = vst [vmem:[%s283 + $0xb0] sm:$0xff] %v1794
      %1855 = vst [vmem:[%s283 + $0xb8] sm:$0xff] %v1797
      %1856 = vst [vmem:[%s283 + $0xc0] sm:$0xff] %v1802
      %1857 = vst [vmem:[%s283 + $0xc8] sm:$0xff] %v1805
      %1858 = vst [vmem:[%s283 + $0xd0] sm:$0xff] %v1810
      %1859 = vst [vmem:[%s283 + $0xd8] sm:$0xff] %v1813
      %1860 = vst [vmem:[%s283 + $0xe0] sm:$0xff] %v1818
      %1861 = vst [vmem:[%s283 + $0xe8] sm:$0xff] %v1821
      %1862 = vst [vmem:[%s283 + $0xf0] sm:$0xff] %v1826
      %1863 = vst [vmem:[%s283 + $0xf8] sm:$0xff] %v1829
      %s1864 = smul.u32 32, %s18
      %p1865 = scmp.lt.s32.totalorder %s1864, 63
      %s1866 = scalar_select %p1865, %s1864, 63
      %s1867 = smul.addr %s1866, 8
      %s1868 = scalar_lea.vmem %s7, %s1867
      // Predicated region
      $region49: #{mlp_bce_forward.1} parent=47 // pred_check
        %p1869 = pneg %p188
      $region50: #{mlp_bce_forward.1} parent=47 // pred_check_branch
        %1871 = sbr.rel (%p1869) target = $region52
      $region51: #{mlp_bce_forward.1} parent=47 // pred_region
        %s1872 = smul.u32 32, %s18
      $region52: #{mlp_bce_forward.1} parent=47 // pred_fallthru
        _
    $region48: #{mlp_bce_forward.1} parent=5 // pred_fallthru
      _
    %p1873 = scmp.le.s32.totalorder 2, %s13
    // Predicated region
    $region53: #{mlp_bce_forward.1} parent=5 // pred_check
      %p1874 = pneg %p1873
    $region54: #{mlp_bce_forward.1} parent=5 // pred_check_branch
      %1876 = sbr.rel (%p1874) target = $region56
    $region55: #{mlp_bce_forward.1} parent=5 // pred_region
      %s1877 = ssub.s32 %s13, 2
      // Predicated region
      $region57: #{mlp_bce_forward.1} parent=55 // pred_check
        %p1878 = pneg %p194
      $region58: #{mlp_bce_forward.1} parent=55 // pred_check_branch
        %1880 = sbr.rel (%p1878) target = $region60
      $region59: #{mlp_bce_forward.1} parent=55 // pred_region
        %s1881 = smul.u32 32, %s19
        %p1882 = scmp.lt.s32.totalorder %s1881, 63
        %s1883 = scalar_select %p1882, %s1881, 63
        %s1884 = smul.addr %s1883, 8
        %s1885 = scalar_lea.vmem %s7, %s1884
      $region60: #{mlp_bce_forward.1} parent=55 // pred_fallthru
        _
    $region56: #{mlp_bce_forward.1} parent=5 // pred_fallthru
      _
  $region6: #{mlp_bce_forward.1} parent=0 // loop_footer
    %s17 = sadd.s32 1, %s13
  $region7: #{mlp_bce_forward.1} parent=0 // loop_footer_branch
    %12 = sbr.rel target = $region3
  $region8: #{mlp_bce_forward.1} parent=0 // loop_exit
    _

</llo_original>
